<compile_context>
chip_gen: v6e
topology: v6e:2x2x1
jax: 0.10.0
libtpu: 0.0.40
codegen_flags: <defaults>
</compile_context>

<pallas_src>
import jax
import jax.numpy as jnp
from jax.experimental import pallas as pl
from jax.experimental.pallas import tpu as pltpu


def _mlp_kernel(x_ref, w1_ref, wr_ref, b_ref, o_ref):
    """Whole 5-layer forward pass for one batch tile, entirely in VMEM.

    x_ref:  (bb, D_in)   f32 activation tile (cast to bf16 in-kernel)
    w1_ref: (D_in, H)    bf16 first-layer weight (already transposed)
    wr_ref: (4, H, H)    bf16 hidden-layer weights (already transposed, stacked)
    b_ref:  (8, H)       f32 biases (rows 0..4 valid, rest zero padding)
    o_ref:  (bb, H)      output tile (bf16 by default)
    """
    f32 = jnp.float32
    cdt = w1_ref.dtype  # compute dtype (bf16)

    # Layer 1: Linear + ReLU.  Cast x on the VPU right before the MXU.
    h = jnp.dot(x_ref[...].astype(cdt), w1_ref[...], preferred_element_type=f32)
    h = jnp.maximum(h + b_ref[0:1, :], 0.0)

    # Layers 2-4: Linear + ReLU (statically unrolled).
    for k in range(3):
        h = jnp.dot(h.astype(cdt), wr_ref[k], preferred_element_type=f32)
        h = jnp.maximum(h + b_ref[k + 1:k + 2, :], 0.0)

    # Layer 5: Linear + Tanh.
    h = jnp.dot(h.astype(cdt), wr_ref[3], preferred_element_type=f32)
    h = jnp.tanh(h + b_ref[4:5, :])

    o_ref[...] = h.astype(o_ref.dtype)


def prepare_params(params, compute_dtype=jnp.bfloat16):
    """One-time preprocessing of PyTorch-layout params [(W(out,in), b(out,))]*5:
    transpose to (in,out), cast weights to bf16, stack hidden weights & biases."""
    w1_t = params[0][0].T.astype(compute_dtype)                                  # (D_in, H)
    w_rest_t = jnp.stack([W.T.astype(compute_dtype) for (W, _) in params[1:]])   # (4, H, H)
    b_stack = jnp.stack([b.astype(jnp.float32) for (_, b) in params])            # (5, H)
    b_stack = jnp.pad(b_stack, ((0, 8 - b_stack.shape[0]), (0, 0)))              # (8, H)
    return w1_t, w_rest_t, b_stack


def _tensorcores_per_chip():
    """Conservative per-device TensorCore count (perf heuristic only)."""
    try:
        kind = jax.devices()[0].device_kind.lower()
    except Exception:
        return 1
    # v7x exposes 2 TensorCores per device; v4/v5p megacore also presents 2.
    if any(tag in kind for tag in ("v7", "v4", "v5p")):
        return 2
    return 1


def _pick_block_batch(b_padded, requested, n_cores):
    """Pick a batch-tile size: a multiple of 8 that divides b_padded."""
    assert b_padded % 8 == 0 and b_padded >= 8
    if requested is None:
        if n_cores > 1 and b_padded >= 512:
            # 2 TensorCores: keep grid >= 2 so the "parallel" axis shards
            # across TCs, with per-step tiles of at least 256 rows, capped so
            # the tile stays a small fraction of v7x's 64 MiB VMEM.
            target = min(max(256, b_padded // 2), 4096)
        else:
            # Single TC (or tiny batch): the grid is a serial loop, so extra
            # steps are pure overhead -> one big tile (~1.3 KB VMEM per row).
            target = min(b_padded, 2048)
    else:
        target = max(8, (int(requested) // 8) * 8)
    bb = min(max(target, 8), b_padded)
    bb -= bb % 8
    while b_padded % bb:       # terminates: bb=8 always divides b_padded
        bb -= 8
    return max(bb, 8)


def _vmem_limit_bytes(bb, d_in, h):
    """Realistic VMEM request: double-buffered x/out tiles + resident params
    + f32 intermediates, with 2x headroom, clamped to [8 MiB, 64 MiB]."""
    x_tile = 2 * bb * d_in * 4                       # double-buffered f32 input tile
    o_tile = 2 * bb * h * 2                          # double-buffered bf16 output tile
    weights = (d_in * h + 4 * h * h) * 2 + 8 * h * 4
    interm = 8 * bb * h * 4                          # f32 temporaries in the body
    est = x_tile + o_tile + 2 * weights + interm
    return int(min(64 * 1024 * 1024, max(8 * 1024 * 1024, 2 * est)))


def a2c_base_forward(x, prepped_params, *, block_batch=None, out_dtype=jnp.bfloat16):
    """x: (B, D_in) float32.  prepped_params: output of prepare_params()."""
    w1_t, wr_t, b_stack = prepped_params
    B, D_in = x.shape
    H = w1_t.shape[1]
    assert w1_t.shape[0] == D_in

    # Zero-pad ragged batches up to a multiple of 8; slice off afterwards.
    B_pad = ((B + 7) // 8) * 8
    x_pad = jnp.pad(x, ((0, B_pad - B), (0, 0))) if B_pad != B else x

    n_cores = _tensorcores_per_chip()
    bb = _pick_block_batch(B_pad, block_batch, n_cores)
    grid = (B_pad // bb,)

    flops = 2 * B_pad * (D_in * H + 4 * H * H)
    transcendentals = B_pad * H  # final tanh
    bytes_accessed = (
        x_pad.size * x_pad.dtype.itemsize
        + B_pad * H * jnp.dtype(out_dtype).itemsize
        + w1_t.size * w1_t.dtype.itemsize
        + wr_t.size * wr_t.dtype.itemsize
        + b_stack.size * b_stack.dtype.itemsize
    )

    def _call(use_buffered):
        def const_spec(shape, index_map):
            if use_buffered:
                # Constant-index blocks never change -> single buffer is enough.
                return pl.BlockSpec(shape, index_map, pipeline_mode=pl.Buffered(1))
            return pl.BlockSpec(shape, index_map)

        return pl.pallas_call(
            _mlp_kernel,
            out_shape=jax.ShapeDtypeStruct((B_pad, H), out_dtype),
            grid_spec=pltpu.PrefetchScalarGridSpec(
                num_scalar_prefetch=0,
                grid=grid,
                in_specs=[
                    pl.BlockSpec((bb, D_in), lambda i: (i, 0)),      # x tile (f32)
                    const_spec((D_in, H), lambda i: (0, 0)),         # w1 (resident)
                    const_spec((4, H, H), lambda i: (0, 0, 0)),      # w2..w5 (resident)
                    const_spec((8, H), lambda i: (0, 0)),            # biases (resident)
                ],
                out_specs=pl.BlockSpec((bb, H), lambda i: (i, 0)),
            ),
            compiler_params=pltpu.CompilerParams(
                dimension_semantics=("parallel",),
                vmem_limit_bytes=_vmem_limit_bytes(bb, D_in, H),
            ),
            cost_estimate=pl.CostEstimate(
                flops=flops,
                transcendentals=transcendentals,
                bytes_accessed=bytes_accessed,
            ),
        )(x_pad, w1_t, wr_t, b_stack)

    try:
        out = _call(True)
    except Exception:
        # Fallback if this jax build rejects pipeline_mode / Buffered(1).
        out = _call(False)

    return out[:B] if B_pad != B else out


def init_a2c_params(key, input_len, hidden_dim=256, dtype=jnp.float32):
    """Deterministic init mimicking nn.Linear default U(-1/sqrt(fan_in), 1/sqrt(fan_in))."""
    dims = [(hidden_dim, input_len)] + [(hidden_dim, hidden_dim)] * 4
    params = []
    for (out_d, in_d) in dims:
        key, kw, kb = jax.random.split(key, 3)
        bound = 1.0 / jnp.sqrt(jnp.array(in_d, dtype))
        W = jax.random.uniform(kw, (out_d, in_d), dtype, minval=-bound, maxval=bound)
        b = jax.random.uniform(kb, (out_d,), dtype, minval=-bound, maxval=bound)
        params.append((W, b))
    return params


def reference_forward(x, params, compute_dtype=jnp.bfloat16):
    """Pure-JAX reference with the same bf16-operand / f32-accumulate numerics."""
    h = x
    n = len(params)
    for li, (W, b) in enumerate(params):
        h = jnp.dot(h.astype(compute_dtype), W.T.astype(compute_dtype),
                    preferred_element_type=jnp.float32) + b.astype(jnp.float32)
        h = jnp.tanh(h) if li == n - 1 else jnp.maximum(h, 0.0)
    return h


if __name__ == "__main__":
    key = jax.random.PRNGKey(0)
    # Small shapes for the smoke test (module default hidden_dim is 256; any
    # hidden_dim is valid — 128 keeps the lane dim full while staying small).
    batch, input_len, hidden_dim = 64, 32, 128

    k_x, k_p = jax.random.split(key)
    x = jax.random.normal(k_x, (batch, input_len), jnp.float32)
    params = init_a2c_params(k_p, input_len, hidden_dim)

    prepped = prepare_params(params)               # transpose/cast/stack ONCE
    out = a2c_base_forward(x, prepped)             # bf16 output by default
    out = jax.block_until_ready(out)

    ref = reference_forward(x, params)
    assert out.shape == (batch, hidden_dim)
    assert jnp.allclose(out.astype(jnp.float32), ref, atol=3e-2, rtol=3e-2), \
        "mismatch vs reference"

    print("KERNEL_OK")
</pallas_src>

<mosaic_0001>
module attributes {stable_mosaic.version = 11 : i64} {
  func.func @_mlp_kernel(%arg0: i32, %arg1: memref<64x32xf32, #tpu.memory_space<vmem>>, %arg2: memref<32x128xbf16, #tpu.memory_space<vmem>>, %arg3: memref<4x128x128xbf16, #tpu.memory_space<vmem>>, %arg4: memref<8x128xf32, #tpu.memory_space<vmem>>, %arg5: memref<64x128xbf16, #tpu.memory_space<vmem>>) attributes {dimension_semantics = [#tpu.dimension_semantics<parallel>], iteration_bounds = array<i64: 1>, scalar_prefetch = 0 : i64, scratch_operands = 0 : i64, tpu.core_type = #tpu.core_type<tc>, window_params = [{transform_indices = @transform_0, window_bounds = array<i64: 64, 32>}, {pipeline_mode = #tpu.pipeline_mode<synchronous>, transform_indices = @transform_1, window_bounds = array<i64: 32, 128>}, {pipeline_mode = #tpu.pipeline_mode<synchronous>, transform_indices = @transform_2, window_bounds = array<i64: 4, 128, 128>}, {pipeline_mode = #tpu.pipeline_mode<synchronous>, transform_indices = @transform_3, window_bounds = array<i64: 8, 128>}, {transform_indices = @transform_4, window_bounds = array<i64: 64, 128>}]} {
    %c0 = arith.constant 0 : index
    %c0_0 = arith.constant 0 : index
    %0 = vector.load %arg1[%c0, %c0_0] : memref<64x32xf32, #tpu.memory_space<vmem>>, vector<64x32xf32>
    %1 = arith.truncf %0 : vector<64x32xf32> to vector<64x32xbf16>
    %c0_1 = arith.constant 0 : index
    %c0_2 = arith.constant 0 : index
    %2 = vector.load %arg2[%c0_1, %c0_2] : memref<32x128xbf16, #tpu.memory_space<vmem>>, vector<32x128xbf16>
    %cst = arith.constant dense<0.000000e+00> : vector<64x128xf32>
    %3 = tpu.matmul %1, %2, %cst {dimension_numbers = #tpu.dot_dimension_numbers<[1], [0], [0], [1], [0, 0, 1, 1], [], []>} : vector<64x32xbf16>, vector<32x128xbf16>, vector<64x128xf32> -> vector<64x128xf32>
    %c0_3 = arith.constant 0 : index
    %c0_4 = arith.constant 0 : index
    %4 = vector.load %arg4[%c0_3, %c0_4] : memref<8x128xf32, #tpu.memory_space<vmem>>, vector<1x128xf32>
    %5 = vector.broadcast %4 : vector<1x128xf32> to vector<64x128xf32>
    %6 = arith.addf %3, %5 : vector<64x128xf32>
    %cst_5 = arith.constant 0.000000e+00 : f32
    %7 = vector.broadcast %cst_5 : f32 to vector<64x128xf32>
    %8 = arith.maximumf %6, %7 : vector<64x128xf32>
    %9 = arith.truncf %8 : vector<64x128xf32> to vector<64x128xbf16>
    %c0_6 = arith.constant 0 : index
    %c0_7 = arith.constant 0 : index
    %c0_8 = arith.constant 0 : index
    %10 = vector.load %arg3[%c0_6, %c0_7, %c0_8] : memref<4x128x128xbf16, #tpu.memory_space<vmem>>, vector<1x128x128xbf16>
    %11 = vector.shape_cast %10 : vector<1x128x128xbf16> to vector<128x128xbf16>
    %cst_9 = arith.constant dense<0.000000e+00> : vector<64x128xf32>
    %12 = tpu.matmul %9, %11, %cst_9 {dimension_numbers = #tpu.dot_dimension_numbers<[1], [0], [0], [1], [0, 0, 1, 1], [], []>} : vector<64x128xbf16>, vector<128x128xbf16>, vector<64x128xf32> -> vector<64x128xf32>
    %c1 = arith.constant 1 : index
    %c0_10 = arith.constant 0 : index
    %13 = vector.load %arg4[%c1, %c0_10] : memref<8x128xf32, #tpu.memory_space<vmem>>, vector<1x128xf32>
    %14 = vector.broadcast %13 : vector<1x128xf32> to vector<64x128xf32>
    %15 = arith.addf %12, %14 : vector<64x128xf32>
    %cst_11 = arith.constant 0.000000e+00 : f32
    %16 = vector.broadcast %cst_11 : f32 to vector<64x128xf32>
    %17 = arith.maximumf %15, %16 : vector<64x128xf32>
    %18 = arith.truncf %17 : vector<64x128xf32> to vector<64x128xbf16>
    %c1_12 = arith.constant 1 : index
    %c0_13 = arith.constant 0 : index
    %c0_14 = arith.constant 0 : index
    %19 = vector.load %arg3[%c1_12, %c0_13, %c0_14] : memref<4x128x128xbf16, #tpu.memory_space<vmem>>, vector<1x128x128xbf16>
    %20 = vector.shape_cast %19 : vector<1x128x128xbf16> to vector<128x128xbf16>
    %cst_15 = arith.constant dense<0.000000e+00> : vector<64x128xf32>
    %21 = tpu.matmul %18, %20, %cst_15 {dimension_numbers = #tpu.dot_dimension_numbers<[1], [0], [0], [1], [0, 0, 1, 1], [], []>} : vector<64x128xbf16>, vector<128x128xbf16>, vector<64x128xf32> -> vector<64x128xf32>
    %c2 = arith.constant 2 : index
    %c0_16 = arith.constant 0 : index
    %22 = vector.load %arg4[%c2, %c0_16] : memref<8x128xf32, #tpu.memory_space<vmem>>, vector<1x128xf32>
    %23 = vector.broadcast %22 : vector<1x128xf32> to vector<64x128xf32>
    %24 = arith.addf %21, %23 : vector<64x128xf32>
    %cst_17 = arith.constant 0.000000e+00 : f32
    %25 = vector.broadcast %cst_17 : f32 to vector<64x128xf32>
    %26 = arith.maximumf %24, %25 : vector<64x128xf32>
    %27 = arith.truncf %26 : vector<64x128xf32> to vector<64x128xbf16>
    %c2_18 = arith.constant 2 : index
    %c0_19 = arith.constant 0 : index
    %c0_20 = arith.constant 0 : index
    %28 = vector.load %arg3[%c2_18, %c0_19, %c0_20] : memref<4x128x128xbf16, #tpu.memory_space<vmem>>, vector<1x128x128xbf16>
    %29 = vector.shape_cast %28 : vector<1x128x128xbf16> to vector<128x128xbf16>
    %cst_21 = arith.constant dense<0.000000e+00> : vector<64x128xf32>
    %30 = tpu.matmul %27, %29, %cst_21 {dimension_numbers = #tpu.dot_dimension_numbers<[1], [0], [0], [1], [0, 0, 1, 1], [], []>} : vector<64x128xbf16>, vector<128x128xbf16>, vector<64x128xf32> -> vector<64x128xf32>
    %c3 = arith.constant 3 : index
    %c0_22 = arith.constant 0 : index
    %31 = vector.load %arg4[%c3, %c0_22] : memref<8x128xf32, #tpu.memory_space<vmem>>, vector<1x128xf32>
    %32 = vector.broadcast %31 : vector<1x128xf32> to vector<64x128xf32>
    %33 = arith.addf %30, %32 : vector<64x128xf32>
    %cst_23 = arith.constant 0.000000e+00 : f32
    %34 = vector.broadcast %cst_23 : f32 to vector<64x128xf32>
    %35 = arith.maximumf %33, %34 : vector<64x128xf32>
    %36 = arith.truncf %35 : vector<64x128xf32> to vector<64x128xbf16>
    %c3_24 = arith.constant 3 : index
    %c0_25 = arith.constant 0 : index
    %c0_26 = arith.constant 0 : index
    %37 = vector.load %arg3[%c3_24, %c0_25, %c0_26] : memref<4x128x128xbf16, #tpu.memory_space<vmem>>, vector<1x128x128xbf16>
    %38 = vector.shape_cast %37 : vector<1x128x128xbf16> to vector<128x128xbf16>
    %cst_27 = arith.constant dense<0.000000e+00> : vector<64x128xf32>
    %39 = tpu.matmul %36, %38, %cst_27 {dimension_numbers = #tpu.dot_dimension_numbers<[1], [0], [0], [1], [0, 0, 1, 1], [], []>} : vector<64x128xbf16>, vector<128x128xbf16>, vector<64x128xf32> -> vector<64x128xf32>
    %c4 = arith.constant 4 : index
    %c0_28 = arith.constant 0 : index
    %40 = vector.load %arg4[%c4, %c0_28] : memref<8x128xf32, #tpu.memory_space<vmem>>, vector<1x128xf32>
    %41 = vector.broadcast %40 : vector<1x128xf32> to vector<64x128xf32>
    %42 = arith.addf %39, %41 : vector<64x128xf32>
    %43 = math.tanh %42 : vector<64x128xf32>
    %44 = arith.truncf %43 : vector<64x128xf32> to vector<64x128xbf16>
    %c0_29 = arith.constant 0 : index
    %c0_30 = arith.constant 0 : index
    %45 = vector.load %arg5[%c0_29, %c0_30] : memref<64x128xbf16, #tpu.memory_space<vmem>>, vector<64x128xbf16>
    tpu.vector_store %arg5[%c0_29, %c0_30], %44 {strides = array<i32>} : memref<64x128xbf16, #tpu.memory_space<vmem>>, vector<64x128xbf16>,
    return
  }
  func.func @transform_0(%arg0: i32) -> (i32, i32) {
    %c0_i32 = arith.constant 0 : i32
    %c0_i32_0 = arith.constant 0 : i32
    return %arg0, %c0_i32 : i32, i32
  }
  func.func @transform_1(%arg0: i32) -> (i32, i32) {
    %c0_i32 = arith.constant 0 : i32
    %c0_i32_0 = arith.constant 0 : i32
    %c0_i32_1 = arith.constant 0 : i32
    return %c0_i32, %c0_i32_0 : i32, i32
  }
  func.func @transform_2(%arg0: i32) -> (i32, i32, i32) {
    %c0_i32 = arith.constant 0 : i32
    %c0_i32_0 = arith.constant 0 : i32
    %c0_i32_1 = arith.constant 0 : i32
    %c0_i32_2 = arith.constant 0 : i32
    return %c0_i32, %c0_i32_0, %c0_i32_1 : i32, i32, i32
  }
  func.func @transform_3(%arg0: i32) -> (i32, i32) {
    %c0_i32 = arith.constant 0 : i32
    %c0_i32_0 = arith.constant 0 : i32
    %c0_i32_1 = arith.constant 0 : i32
    return %c0_i32, %c0_i32_0 : i32, i32
  }
  func.func @transform_4(%arg0: i32) -> (i32, i32) {
    %c0_i32 = arith.constant 0 : i32
    %c0_i32_0 = arith.constant 0 : i32
    return %arg0, %c0_i32 : i32, i32
  }
}

module attributes {stable_mosaic.version = 11 : i64} {
  func.func @_mlp_kernel(%arg0: i32, %arg1: memref<64x32xf32, #tpu.memory_space<vmem>>, %arg2: memref<32x128xbf16, #tpu.memory_space<vmem>>, %arg3: memref<4x128x128xbf16, #tpu.memory_space<vmem>>, %arg4: memref<8x128xf32, #tpu.memory_space<vmem>>, %arg5: memref<64x128xbf16, #tpu.memory_space<vmem>>) attributes {dimension_semantics = [#tpu.dimension_semantics<parallel>], iteration_bounds = array<i64: 1>, scalar_prefetch = 0 : i64, scratch_operands = 0 : i64, tpu.core_type = #tpu.core_type<tc>, window_params = [{transform_indices = @transform_0, window_bounds = array<i64: 64, 32>}, {pipeline_mode = #tpu.pipeline_mode<synchronous>, transform_indices = @transform_1, window_bounds = array<i64: 32, 128>}, {pipeline_mode = #tpu.pipeline_mode<synchronous>, transform_indices = @transform_2, window_bounds = array<i64: 4, 128, 128>}, {pipeline_mode = #tpu.pipeline_mode<synchronous>, transform_indices = @transform_3, window_bounds = array<i64: 8, 128>}, {transform_indices = @transform_4, window_bounds = array<i64: 64, 128>}]} {
    %c0 = arith.constant 0 : index
    %c0_0 = arith.constant 0 : index
    %0 = vector.load %arg1[%c0, %c0_0] : memref<64x32xf32, #tpu.memory_space<vmem>>, vector<64x32xf32>
    %1 = arith.truncf %0 : vector<64x32xf32> to vector<64x32xbf16>
    %c0_1 = arith.constant 0 : index
    %c0_2 = arith.constant 0 : index
    %2 = vector.load %arg2[%c0_1, %c0_2] : memref<32x128xbf16, #tpu.memory_space<vmem>>, vector<32x128xbf16>
    %cst = arith.constant dense<0.000000e+00> : vector<64x128xf32>
    %3 = tpu.matmul %1, %2, %cst {dimension_numbers = #tpu.dot_dimension_numbers<[1], [0], [0], [1], [0, 0, 1, 1], [], []>} : vector<64x32xbf16>, vector<32x128xbf16>, vector<64x128xf32> -> vector<64x128xf32>
    %c0_3 = arith.constant 0 : index
    %c0_4 = arith.constant 0 : index
    %4 = vector.load %arg4[%c0_3, %c0_4] : memref<8x128xf32, #tpu.memory_space<vmem>>, vector<1x128xf32>
    %5 = vector.broadcast %4 : vector<1x128xf32> to vector<64x128xf32>
    %6 = arith.addf %3, %5 : vector<64x128xf32>
    %cst_5 = arith.constant 0.000000e+00 : f32
    %7 = vector.broadcast %cst_5 : f32 to vector<64x128xf32>
    %8 = arith.maximumf %6, %7 : vector<64x128xf32>
    %9 = arith.truncf %8 : vector<64x128xf32> to vector<64x128xbf16>
    %c0_6 = arith.constant 0 : index
    %c0_7 = arith.constant 0 : index
    %c0_8 = arith.constant 0 : index
    %10 = vector.load %arg3[%c0_6, %c0_7, %c0_8] : memref<4x128x128xbf16, #tpu.memory_space<vmem>>, vector<1x128x128xbf16>
    %11 = vector.shape_cast %10 : vector<1x128x128xbf16> to vector<128x128xbf16>
    %cst_9 = arith.constant dense<0.000000e+00> : vector<64x128xf32>
    %12 = tpu.matmul %9, %11, %cst_9 {dimension_numbers = #tpu.dot_dimension_numbers<[1], [0], [0], [1], [0, 0, 1, 1], [], []>} : vector<64x128xbf16>, vector<128x128xbf16>, vector<64x128xf32> -> vector<64x128xf32>
    %c1 = arith.constant 1 : index
    %c0_10 = arith.constant 0 : index
    %13 = vector.load %arg4[%c1, %c0_10] : memref<8x128xf32, #tpu.memory_space<vmem>>, vector<1x128xf32>
    %14 = vector.broadcast %13 : vector<1x128xf32> to vector<64x128xf32>
    %15 = arith.addf %12, %14 : vector<64x128xf32>
    %cst_11 = arith.constant 0.000000e+00 : f32
    %16 = vector.broadcast %cst_11 : f32 to vector<64x128xf32>
    %17 = arith.maximumf %15, %16 : vector<64x128xf32>
    %18 = arith.truncf %17 : vector<64x128xf32> to vector<64x128xbf16>
    %c1_12 = arith.constant 1 : index
    %c0_13 = arith.constant 0 : index
    %c0_14 = arith.constant 0 : index
    %19 = vector.load %arg3[%c1_12, %c0_13, %c0_14] : memref<4x128x128xbf16, #tpu.memory_space<vmem>>, vector<1x128x128xbf16>
    %20 = vector.shape_cast %19 : vector<1x128x128xbf16> to vector<128x128xbf16>
    %cst_15 = arith.constant dense<0.000000e+00> : vector<64x128xf32>
    %21 = tpu.matmul %18, %20, %cst_15 {dimension_numbers = #tpu.dot_dimension_numbers<[1], [0], [0], [1], [0, 0, 1, 1], [], []>} : vector<64x128xbf16>, vector<128x128xbf16>, vector<64x128xf32> -> vector<64x128xf32>
    %c2 = arith.constant 2 : index
    %c0_16 = arith.constant 0 : index
    %22 = vector.load %arg4[%c2, %c0_16] : memref<8x128xf32, #tpu.memory_space<vmem>>, vector<1x128xf32>
    %23 = vector.broadcast %22 : vector<1x128xf32> to vector<64x128xf32>
    %24 = arith.addf %21, %23 : vector<64x128xf32>
    %cst_17 = arith.constant 0.000000e+00 : f32
    %25 = vector.broadcast %cst_17 : f32 to vector<64x128xf32>
    %26 = arith.maximumf %24, %25 : vector<64x128xf32>
    %27 = arith.truncf %26 : vector<64x128xf32> to vector<64x128xbf16>
    %c2_18 = arith.constant 2 : index
    %c0_19 = arith.constant 0 : index
    %c0_20 = arith.constant 0 : index
    %28 = vector.load %arg3[%c2_18, %c0_19, %c0_20] : memref<4x128x128xbf16, #tpu.memory_space<vmem>>, vector<1x128x128xbf16>
    %29 = vector.shape_cast %28 : vector<1x128x128xbf16> to vector<128x128xbf16>
    %cst_21 = arith.constant dense<0.000000e+00> : vector<64x128xf32>
    %30 = tpu.matmul %27, %29, %cst_21 {dimension_numbers = #tpu.dot_dimension_numbers<[1], [0], [0], [1], [0, 0, 1, 1], [], []>} : vector<64x128xbf16>, vector<128x128xbf16>, vector<64x128xf32> -> vector<64x128xf32>
    %c3 = arith.constant 3 : index
    %c0_22 = arith.constant 0 : index
    %31 = vector.load %arg4[%c3, %c0_22] : memref<8x128xf32, #tpu.memory_space<vmem>>, vector<1x128xf32>
    %32 = vector.broadcast %31 : vector<1x128xf32> to vector<64x128xf32>
    %33 = arith.addf %30, %32 : vector<64x128xf32>
    %cst_23 = arith.constant 0.000000e+00 : f32
    %34 = vector.broadcast %cst_23 : f32 to vector<64x128xf32>
    %35 = arith.maximumf %33, %34 : vector<64x128xf32>
    %36 = arith.truncf %35 : vector<64x128xf32> to vector<64x128xbf16>
    %c3_24 = arith.constant 3 : index
    %c0_25 = arith.constant 0 : index
    %c0_26 = arith.constant 0 : index
    %37 = vector.load %arg3[%c3_24, %c0_25, %c0_26] : memref<4x128x128xbf16, #tpu.memory_space<vmem>>, vector<1x128x128xbf16>
    %38 = vector.shape_cast %37 : vector<1x128x128xbf16> to vector<128x128xbf16>
    %cst_27 = arith.constant dense<0.000000e+00> : vector<64x128xf32>
    %39 = tpu.matmul %36, %38, %cst_27 {dimension_numbers = #tpu.dot_dimension_numbers<[1], [0], [0], [1], [0, 0, 1, 1], [], []>} : vector<64x128xbf16>, vector<128x128xbf16>, vector<64x128xf32> -> vector<64x128xf32>
    %c4 = arith.constant 4 : index
    %c0_28 = arith.constant 0 : index
    %40 = vector.load %arg4[%c4, %c0_28] : memref<8x128xf32, #tpu.memory_space<vmem>>, vector<1x128xf32>
    %41 = vector.broadcast %40 : vector<1x128xf32> to vector<64x128xf32>
    %42 = arith.addf %39, %41 : vector<64x128xf32>
    %43 = math.tanh %42 : vector<64x128xf32>
    %44 = arith.truncf %43 : vector<64x128xf32> to vector<64x128xbf16>
    %c0_29 = arith.constant 0 : index
    %c0_30 = arith.constant 0 : index
    %45 = vector.load %arg5[%c0_29, %c0_30] : memref<64x128xbf16, #tpu.memory_space<vmem>>, vector<64x128xbf16>
    tpu.vector_store %arg5[%c0_29, %c0_30], %44 {strides = array<i32>} : memref<64x128xbf16, #tpu.memory_space<vmem>>, vector<64x128xbf16>,
    return
  }
  func.func @transform_0(%arg0: i32) -> (i32, i32) {
    %c0_i32 = arith.constant 0 : i32
    %c0_i32_0 = arith.constant 0 : i32
    return %arg0, %c0_i32 : i32, i32
  }
  func.func @transform_1(%arg0: i32) -> (i32, i32) {
    %c0_i32 = arith.constant 0 : i32
    %c0_i32_0 = arith.constant 0 : i32
    %c0_i32_1 = arith.constant 0 : i32
    return %c0_i32, %c0_i32_0 : i32, i32
  }
  func.func @transform_2(%arg0: i32) -> (i32, i32, i32) {
    %c0_i32 = arith.constant 0 : i32
    %c0_i32_0 = arith.constant 0 : i32
    %c0_i32_1 = arith.constant 0 : i32
    %c0_i32_2 = arith.constant 0 : i32
    return %c0_i32, %c0_i32_0, %c0_i32_1 : i32, i32, i32
  }
  func.func @transform_3(%arg0: i32) -> (i32, i32) {
    %c0_i32 = arith.constant 0 : i32
    %c0_i32_0 = arith.constant 0 : i32
    %c0_i32_1 = arith.constant 0 : i32
    return %c0_i32, %c0_i32_0 : i32, i32
  }
  func.func @transform_4(%arg0: i32) -> (i32, i32) {
    %c0_i32 = arith.constant 0 : i32
    %c0_i32_0 = arith.constant 0 : i32
    return %arg0, %c0_i32 : i32, i32
  }
}

</mosaic_0001>

<llo_original>
// kernel: tpu_custom_call.1
$region0: #{tpu_custom_call.1}
  #allocation0 [shape = 'u32[]', space=smem, size = 0x4, offset = 0x4, fixed_abs, tag = 'smem constant byte address 0x4 - core index']
  #allocation1 [shape = 'u32[144,128]{1,0:T(1,128)}', space=vmem, size = 0x12000, scoped, tag = 'internal scratch']
  %s0 = inlined_call_operand.vmem [shape: f32[64,32], index: 0, kind: input, shape index: {}]
  %s1 = inlined_call_operand.vmem [shape: bf16[32,128], index: 1, kind: input, shape index: {}]
  %s2 = inlined_call_operand.hbm [shape: bf16[4,128,128], index: 2, kind: input, shape index: {}]
  %s3 = inlined_call_operand.vmem [shape: f32[8,128], index: 3, kind: input, shape index: {}]
  %s4 = inlined_call_operand.hbm [shape: bf16[64,128], index: 4, kind: output, shape index: {}]
  %s5 = sld [smem:[#allocation0]]
  $region30: #{tpu_custom_call.1} parent=0
    _
  %s7 = ssub.s32 1, %s5
  %s8 = scalar_select 0, %s7, %s5
  $region1: #{tpu_custom_call.1} parent=0
    #allocation2 [shape = 'u8[131072]{0}', space=vmem, size = 0x20000, scoped, tag = 'input window, operand 2, single buffered']
    #allocation3 [shape = 's32[1]{0}', space=sflag, size = 0x4, scoped, tag = 'scoped memory for tpu_custom_call.1']
    #allocation4 [shape = 's32[1]{0}', space=sflag, size = 0x4, scoped, tag = 'scoped memory for tpu_custom_call.1']
    #allocation5 [shape = 'u8[16384]{0}', space=vmem, size = 0x4000, scoped, tag = 'output window, operand 0, single buffered']
    %9 = vsyncpa [#allocation3], 0
    %10 = vsyncpa [#allocation4], 0
    // Predicated region
    $region2: #{tpu_custom_call.1} parent=1 // pred_check
      _
    $region3: #{tpu_custom_call.1} parent=1 // pred_check_branch
      %12 = sbr.rel (0) target = $region5
    $region4: #{tpu_custom_call.1} parent=1 // pred_region
      _
    $region5: #{tpu_custom_call.1} parent=1 // pred_fallthru
      _
    // Predicated region
    $region6: #{tpu_custom_call.1} parent=1 // pred_check
      _
    $region7: #{tpu_custom_call.1} parent=1 // pred_check_branch
      %14 = sbr.rel (0) target = $region9
    $region8: #{tpu_custom_call.1} parent=1 // pred_region
      _
    $region9: #{tpu_custom_call.1} parent=1 // pred_fallthru
      _
    // Predicated region
    $region10: #{tpu_custom_call.1} parent=1 // pred_check
      _
    $region11: #{tpu_custom_call.1} parent=1 // pred_check_branch
      %16 = sbr.rel (0) target = $region13
    $region12: #{tpu_custom_call.1} parent=1 // pred_region
      %s18 = ssub.s32 4096, 4096
      %19 = vsyncadd [#allocation3], %s18
      %s20 = sshll.u32 [#allocation2], 4
      %s21 = int_to_ptr.vmem [resolvable:$true] %s20
      %26 = dma.hbm_to_vmem [thread:$0]  %s2, 4096, %s21, [#allocation3], 64, 64, 4
    $region13: #{tpu_custom_call.1} parent=1 // pred_fallthru
      _
    // Predicated region
    $region14: #{tpu_custom_call.1} parent=1 // pred_check
      _
    $region15: #{tpu_custom_call.1} parent=1 // pred_check_branch
      %28 = sbr.rel (0) target = $region17
    $region16: #{tpu_custom_call.1} parent=1 // pred_region
      _
    $region17: #{tpu_custom_call.1} parent=1 // pred_fallthru
      _
    // Predicated region
    $region18: #{tpu_custom_call.1} parent=1 // pred_check
      _
    $region19: #{tpu_custom_call.1} parent=1 // pred_check_branch
      %30 = sbr.rel (0) target = $region21
    $region20: #{tpu_custom_call.1} parent=1 // pred_region
      %31 = dma.done [#allocation3], 4096
    $region21: #{tpu_custom_call.1} parent=1 // pred_fallthru
      _
    %v33 = vld [vmem:[%s0] sm:$0xff]
    %v34 = vld [vmem:[%s0 + $0x8] sm:$0xff]
    %v35 = vld [vmem:[%s0 + $0x10] sm:$0xff]
    %v36 = vld [vmem:[%s0 + $0x18] sm:$0xff]
    %v37 = vld [vmem:[%s0 + $0x20] sm:$0xff]
    %v38 = vld [vmem:[%s0 + $0x28] sm:$0xff]
    %v39 = vld [vmem:[%s0 + $0x30] sm:$0xff]
    %v40 = vld [vmem:[%s0 + $0x38] sm:$0xff]
    %v41 = vpack.c.bf16 %v34, %v33
    %v42 = vpack.c.bf16 %v36, %v35
    %v43 = vpack.c.bf16 %v38, %v37
    %v44 = vpack.c.bf16 %v40, %v39
    %v45 = vld [vmem:[%s1] sm:$0xf]
    %v46 = vld [vmem:[%s1 + $0x4] sm:$0xf]
    %v47 = vld [vmem:[%s1 + $0x8] sm:$0xf]
    %v48 = vld [vmem:[%s1 + $0xc] sm:$0xf]
    %v49 = vld [vmem:[%s3] sm:$0x1]
    %v50 = vlaneseq
    %v51 = vshrl.u32 %v50, 7
    %v52 = vsub.s32 0, %v51
    %v53 = vrot.slane %v49, %v52
    %v58 = vunpack.c.l.b16 %v45
    %v59 = vunpack.c.l.b16 %v46
    %v60 = vunpack.c.l.b16 %v47
    %v61 = vunpack.c.l.b16 %v48
    %v62 = vpack.c.b16 %v59, %v58
    %v63 = vpack.c.b16 %v61, %v60
    %vm66 = vcmask 261120
    %v68 = vsel %vm66, %v41, 0
    %v71 = vsel %vm66, %v42, 0
    %v74 = vsel %vm66, %v43, 0
    %v77 = vsel %vm66, %v44, 0
    %79 = vmatprep.subr.bf16.mxu0 0
    %80 = vmatpush1.bf16.msra.mxu0 0
    %81 = vmatprep.subr.bf16.mxu0 0
    %82 = vmatpush1.bf16.msra.mxu0 0
    %83 = vmatprep.subr.bf16.mxu0 0
    %84 = vmatpush1.bf16.msra.mxu0 0
    %85 = vmatprep.subr.bf16.mxu0 0
    %86 = vmatpush1.bf16.msra.mxu0 0
    %87 = vmatprep.subr.bf16.mxu0 0
    %88 = vmatpush1.bf16.msra.mxu0 0
    %89 = vmatprep.subr.bf16.mxu0 0
    %90 = vmatpush1.bf16.msra.mxu0 0
    %91 = vmatprep.subr.bf16.mxu0 0
    %92 = vmatpush1.bf16.msra.mxu0 %v63
    %93 = vmatprep.subr.bf16.mxu0 0
    %94 = vmatpush1.bf16.msra.mxu0 %v62
    %95 = vmatprep.subr.bf16.mxu0 0
    %96 = vmatpush2.bf16.msra.mxu0 0
    %97 = vmatprep.subr.bf16.mxu0 0
    %98 = vmatpush2.bf16.msra.mxu0 0
    %99 = vmatprep.subr.bf16.mxu0 0
    %100 = vmatpush2.bf16.msra.mxu0 0
    %101 = vmatprep.subr.bf16.mxu0 0
    %102 = vmatpush2.bf16.msra.mxu0 0
    %103 = vmatprep.subr.bf16.mxu0 0
    %104 = vmatpush2.bf16.msra.mxu0 0
    %105 = vmatprep.subr.bf16.mxu0 0
    %106 = vmatpush2.bf16.msra.mxu0 0
    %107 = vmatprep.subr.bf16.mxu0 0
    %108 = vmatpush2.bf16.msra.mxu0 0
    %109 = vmatprep.subr.bf16.mxu0 0
    %110 = vmatpush2.bf16.msra.mxu0 0
    %111 = vmatprep.mubr.bf16.mxu0 0
    %112 = vmatmul.mubr.bf16.gmra.mxu0 %v68
    %v113 = vpop.f32.mrf.mxu0
    %v114 = vadd.f32 %v53, %v113
    %v115 = vpop.f32.mrf.mxu0
    %v116 = vpop.f32.mrf.mxu0
    %v117 = vadd.f32 %v53, %v116
    %v118 = vpop.f32.mrf.mxu0
    %119 = vmatprep.mubr.bf16.mxu0 0
    %120 = vmatmul.mubr.bf16.gmra.mxu0 %v71
    %v121 = vpop.f32.mrf.mxu0
    %v122 = vadd.f32 %v53, %v121
    %v123 = vpop.f32.mrf.mxu0
    %v124 = vpop.f32.mrf.mxu0
    %v125 = vadd.f32 %v53, %v124
    %v126 = vpop.f32.mrf.mxu0
    %127 = vmatprep.mubr.bf16.mxu0 0
    %128 = vmatmul.mubr.bf16.gmra.mxu0 %v74
    %v129 = vpop.f32.mrf.mxu0
    %v130 = vadd.f32 %v53, %v129
    %v131 = vpop.f32.mrf.mxu0
    %v132 = vpop.f32.mrf.mxu0
    %v133 = vadd.f32 %v53, %v132
    %v134 = vpop.f32.mrf.mxu0
    %135 = vmatprep.mubr.bf16.mxu0 0
    %136 = vmatmul.mubr.bf16.gmra.mxu0 %v77
    %v137 = vpop.f32.mrf.mxu0
    %v138 = vadd.f32 %v53, %v137
    %v139 = vpop.f32.mrf.mxu0
    %v140 = vpop.f32.mrf.mxu0
    %v141 = vadd.f32 %v53, %v140
    %v142 = vpop.f32.mrf.mxu0
    %143 = vdwg.mxu0
    %v144 = vmax.f32 %v114, 0.0
    %v145 = vmax.f32 %v117, 0.0
    %v146 = vmax.f32 %v122, 0.0
    %v147 = vmax.f32 %v125, 0.0
    %v148 = vmax.f32 %v130, 0.0
    %v149 = vmax.f32 %v133, 0.0
    %v150 = vmax.f32 %v138, 0.0
    %v151 = vmax.f32 %v141, 0.0
    %v152 = vpack.c.bf16 %v145, %v144
    %v153 = vpack.c.bf16 %v147, %v146
    %v154 = vpack.c.bf16 %v149, %v148
    %v155 = vpack.c.bf16 %v151, %v150
    %v156 = vld [vmem:[#allocation2] sm:$0xf]
    %v157 = vld [vmem:[#allocation2 + $0x4] sm:$0xf]
    %v158 = vld [vmem:[#allocation2 + $0x8] sm:$0xf]
    %v159 = vld [vmem:[#allocation2 + $0xc] sm:$0xf]
    %v160 = vld [vmem:[#allocation2 + $0x10] sm:$0xf]
    %v161 = vld [vmem:[#allocation2 + $0x14] sm:$0xf]
    %v162 = vld [vmem:[#allocation2 + $0x18] sm:$0xf]
    %v163 = vld [vmem:[#allocation2 + $0x1c] sm:$0xf]
    %v164 = vld [vmem:[#allocation2 + $0x20] sm:$0xf]
    %v165 = vld [vmem:[#allocation2 + $0x24] sm:$0xf]
    %v166 = vld [vmem:[#allocation2 + $0x28] sm:$0xf]
    %v167 = vld [vmem:[#allocation2 + $0x2c] sm:$0xf]
    %v168 = vld [vmem:[#allocation2 + $0x30] sm:$0xf]
    %v169 = vld [vmem:[#allocation2 + $0x34] sm:$0xf]
    %v170 = vld [vmem:[#allocation2 + $0x38] sm:$0xf]
    %v171 = vld [vmem:[#allocation2 + $0x3c] sm:$0xf]
    %v172 = vld [vmem:[%s3 + $0x1] sm:$0x1]
    %v173 = vlaneseq
    %v174 = vshrl.u32 %v173, 7
    %v175 = vsub.s32 0, %v174
    %v176 = vrot.slane %v172, %v175
    %v193 = vunpack.c.l.b16 %v156
    %v194 = vunpack.c.l.b16 %v157
    %v195 = vunpack.c.l.b16 %v158
    %v196 = vunpack.c.l.b16 %v159
    %v197 = vunpack.c.l.b16 %v160
    %v198 = vunpack.c.l.b16 %v161
    %v199 = vunpack.c.l.b16 %v162
    %v200 = vunpack.c.l.b16 %v163
    %v201 = vunpack.c.l.b16 %v164
    %v202 = vunpack.c.l.b16 %v165
    %v203 = vunpack.c.l.b16 %v166
    %v204 = vunpack.c.l.b16 %v167
    %v205 = vunpack.c.l.b16 %v168
    %v206 = vunpack.c.l.b16 %v169
    %v207 = vunpack.c.l.b16 %v170
    %v208 = vunpack.c.l.b16 %v171
    %v209 = vpack.c.b16 %v194, %v193
    %v210 = vpack.c.b16 %v196, %v195
    %v211 = vpack.c.b16 %v198, %v197
    %v212 = vpack.c.b16 %v200, %v199
    %v213 = vpack.c.b16 %v202, %v201
    %v214 = vpack.c.b16 %v204, %v203
    %v215 = vpack.c.b16 %v206, %v205
    %v216 = vpack.c.b16 %v208, %v207
    %225 = vmatprep.subr.bf16.mxu0 0
    %226 = vmatpush1.bf16.msra.mxu0 %v216
    %227 = vmatprep.subr.bf16.mxu0 0
    %228 = vmatpush1.bf16.msra.mxu0 %v215
    %229 = vmatprep.subr.bf16.mxu0 0
    %230 = vmatpush1.bf16.msra.mxu0 %v214
    %231 = vmatprep.subr.bf16.mxu0 0
    %232 = vmatpush1.bf16.msra.mxu0 %v213
    %233 = vmatprep.subr.bf16.mxu0 0
    %234 = vmatpush1.bf16.msra.mxu0 %v212
    %235 = vmatprep.subr.bf16.mxu0 0
    %236 = vmatpush1.bf16.msra.mxu0 %v211
    %237 = vmatprep.subr.bf16.mxu0 0
    %238 = vmatpush1.bf16.msra.mxu0 %v210
    %239 = vmatprep.subr.bf16.mxu0 0
    %240 = vmatpush1.bf16.msra.mxu0 %v209
    %241 = vmatprep.subr.bf16.mxu0 0
    %242 = vmatpush2.bf16.msra.mxu0 0
    %243 = vmatprep.subr.bf16.mxu0 0
    %244 = vmatpush2.bf16.msra.mxu0 0
    %245 = vmatprep.subr.bf16.mxu0 0
    %246 = vmatpush2.bf16.msra.mxu0 0
    %247 = vmatprep.subr.bf16.mxu0 0
    %248 = vmatpush2.bf16.msra.mxu0 0
    %249 = vmatprep.subr.bf16.mxu0 0
    %250 = vmatpush2.bf16.msra.mxu0 0
    %251 = vmatprep.subr.bf16.mxu0 0
    %252 = vmatpush2.bf16.msra.mxu0 0
    %253 = vmatprep.subr.bf16.mxu0 0
    %254 = vmatpush2.bf16.msra.mxu0 0
    %255 = vmatprep.subr.bf16.mxu0 0
    %256 = vmatpush2.bf16.msra.mxu0 0
    %257 = vmatprep.mubr.bf16.mxu0 0
    %258 = vmatmul.mubr.bf16.gmra.mxu0 %v152
    %v259 = vpop.f32.mrf.mxu0
    %v260 = vadd.f32 %v176, %v259
    %v261 = vpop.f32.mrf.mxu0
    %v262 = vpop.f32.mrf.mxu0
    %v263 = vadd.f32 %v176, %v262
    %v264 = vpop.f32.mrf.mxu0
    %265 = vmatprep.mubr.bf16.mxu0 0
    %266 = vmatmul.mubr.bf16.gmra.mxu0 %v153
    %v267 = vpop.f32.mrf.mxu0
    %v268 = vadd.f32 %v176, %v267
    %v269 = vpop.f32.mrf.mxu0
    %v270 = vpop.f32.mrf.mxu0
    %v271 = vadd.f32 %v176, %v270
    %v272 = vpop.f32.mrf.mxu0
    %273 = vmatprep.mubr.bf16.mxu0 0
    %274 = vmatmul.mubr.bf16.gmra.mxu0 %v154
    %v275 = vpop.f32.mrf.mxu0
    %v276 = vadd.f32 %v176, %v275
    %v277 = vpop.f32.mrf.mxu0
    %v278 = vpop.f32.mrf.mxu0
    %v279 = vadd.f32 %v176, %v278
    %v280 = vpop.f32.mrf.mxu0
    %281 = vmatprep.mubr.bf16.mxu0 0
    %282 = vmatmul.mubr.bf16.gmra.mxu0 %v155
    %v283 = vpop.f32.mrf.mxu0
    %v284 = vadd.f32 %v176, %v283
    %v285 = vpop.f32.mrf.mxu0
    %v286 = vpop.f32.mrf.mxu0
    %v287 = vadd.f32 %v176, %v286
    %v288 = vpop.f32.mrf.mxu0
    %289 = vdwg.mxu0
    %v290 = vmax.f32 %v260, 0.0
    %v291 = vmax.f32 %v263, 0.0
    %v292 = vmax.f32 %v268, 0.0
    %v293 = vmax.f32 %v271, 0.0
    %v294 = vmax.f32 %v276, 0.0
    %v295 = vmax.f32 %v279, 0.0
    %v296 = vmax.f32 %v284, 0.0
    %v297 = vmax.f32 %v287, 0.0
    %v298 = vpack.c.bf16 %v291, %v290
    %v299 = vpack.c.bf16 %v293, %v292
    %v300 = vpack.c.bf16 %v295, %v294
    %v301 = vpack.c.bf16 %v297, %v296
    %s302 = scalar_lea.vmem [#allocation2], 64
    %v303 = vld [vmem:[%s302] sm:$0xf]
    %v304 = vld [vmem:[%s302 + $0x4] sm:$0xf]
    %v305 = vld [vmem:[%s302 + $0x8] sm:$0xf]
    %v306 = vld [vmem:[%s302 + $0xc] sm:$0xf]
    %v307 = vld [vmem:[%s302 + $0x10] sm:$0xf]
    %v308 = vld [vmem:[%s302 + $0x14] sm:$0xf]
    %v309 = vld [vmem:[%s302 + $0x18] sm:$0xf]
    %v310 = vld [vmem:[%s302 + $0x1c] sm:$0xf]
    %v311 = vld [vmem:[%s302 + $0x20] sm:$0xf]
    %v312 = vld [vmem:[%s302 + $0x24] sm:$0xf]
    %v313 = vld [vmem:[%s302 + $0x28] sm:$0xf]
    %v314 = vld [vmem:[%s302 + $0x2c] sm:$0xf]
    %v315 = vld [vmem:[%s302 + $0x30] sm:$0xf]
    %v316 = vld [vmem:[%s302 + $0x34] sm:$0xf]
    %v317 = vld [vmem:[%s302 + $0x38] sm:$0xf]
    %v318 = vld [vmem:[%s302 + $0x3c] sm:$0xf]
    %v319 = vld [vmem:[%s3 + $0x2] sm:$0x1]
    %v320 = vlaneseq
    %v321 = vshrl.u32 %v320, 7
    %v322 = vsub.s32 0, %v321
    %v323 = vrot.slane %v319, %v322
    %v340 = vunpack.c.l.b16 %v303
    %v341 = vunpack.c.l.b16 %v304
    %v342 = vunpack.c.l.b16 %v305
    %v343 = vunpack.c.l.b16 %v306
    %v344 = vunpack.c.l.b16 %v307
    %v345 = vunpack.c.l.b16 %v308
    %v346 = vunpack.c.l.b16 %v309
    %v347 = vunpack.c.l.b16 %v310
    %v348 = vunpack.c.l.b16 %v311
    %v349 = vunpack.c.l.b16 %v312
    %v350 = vunpack.c.l.b16 %v313
    %v351 = vunpack.c.l.b16 %v314
    %v352 = vunpack.c.l.b16 %v315
    %v353 = vunpack.c.l.b16 %v316
    %v354 = vunpack.c.l.b16 %v317
    %v355 = vunpack.c.l.b16 %v318
    %v356 = vpack.c.b16 %v341, %v340
    %v357 = vpack.c.b16 %v343, %v342
    %v358 = vpack.c.b16 %v345, %v344
    %v359 = vpack.c.b16 %v347, %v346
    %v360 = vpack.c.b16 %v349, %v348
    %v361 = vpack.c.b16 %v351, %v350
    %v362 = vpack.c.b16 %v353, %v352
    %v363 = vpack.c.b16 %v355, %v354
    %372 = vmatprep.subr.bf16.mxu0 0
    %373 = vmatpush1.bf16.msra.mxu0 %v363
    %374 = vmatprep.subr.bf16.mxu0 0
    %375 = vmatpush1.bf16.msra.mxu0 %v362
    %376 = vmatprep.subr.bf16.mxu0 0
    %377 = vmatpush1.bf16.msra.mxu0 %v361
    %378 = vmatprep.subr.bf16.mxu0 0
    %379 = vmatpush1.bf16.msra.mxu0 %v360
    %380 = vmatprep.subr.bf16.mxu0 0
    %381 = vmatpush1.bf16.msra.mxu0 %v359
    %382 = vmatprep.subr.bf16.mxu0 0
    %383 = vmatpush1.bf16.msra.mxu0 %v358
    %384 = vmatprep.subr.bf16.mxu0 0
    %385 = vmatpush1.bf16.msra.mxu0 %v357
    %386 = vmatprep.subr.bf16.mxu0 0
    %387 = vmatpush1.bf16.msra.mxu0 %v356
    %388 = vmatprep.subr.bf16.mxu0 0
    %389 = vmatpush2.bf16.msra.mxu0 0
    %390 = vmatprep.subr.bf16.mxu0 0
    %391 = vmatpush2.bf16.msra.mxu0 0
    %392 = vmatprep.subr.bf16.mxu0 0
    %393 = vmatpush2.bf16.msra.mxu0 0
    %394 = vmatprep.subr.bf16.mxu0 0
    %395 = vmatpush2.bf16.msra.mxu0 0
    %396 = vmatprep.subr.bf16.mxu0 0
    %397 = vmatpush2.bf16.msra.mxu0 0
    %398 = vmatprep.subr.bf16.mxu0 0
    %399 = vmatpush2.bf16.msra.mxu0 0
    %400 = vmatprep.subr.bf16.mxu0 0
    %401 = vmatpush2.bf16.msra.mxu0 0
    %402 = vmatprep.subr.bf16.mxu0 0
    %403 = vmatpush2.bf16.msra.mxu0 0
    %404 = vmatprep.mubr.bf16.mxu0 0
    %405 = vmatmul.mubr.bf16.gmra.mxu0 %v298
    %v406 = vpop.f32.mrf.mxu0
    %v407 = vadd.f32 %v323, %v406
    %v408 = vpop.f32.mrf.mxu0
    %v409 = vpop.f32.mrf.mxu0
    %v410 = vadd.f32 %v323, %v409
    %v411 = vpop.f32.mrf.mxu0
    %412 = vmatprep.mubr.bf16.mxu0 0
    %413 = vmatmul.mubr.bf16.gmra.mxu0 %v299
    %v414 = vpop.f32.mrf.mxu0
    %v415 = vadd.f32 %v323, %v414
    %v416 = vpop.f32.mrf.mxu0
    %v417 = vpop.f32.mrf.mxu0
    %v418 = vadd.f32 %v323, %v417
    %v419 = vpop.f32.mrf.mxu0
    %420 = vmatprep.mubr.bf16.mxu0 0
    %421 = vmatmul.mubr.bf16.gmra.mxu0 %v300
    %v422 = vpop.f32.mrf.mxu0
    %v423 = vadd.f32 %v323, %v422
    %v424 = vpop.f32.mrf.mxu0
    %v425 = vpop.f32.mrf.mxu0
    %v426 = vadd.f32 %v323, %v425
    %v427 = vpop.f32.mrf.mxu0
    %428 = vmatprep.mubr.bf16.mxu0 0
    %429 = vmatmul.mubr.bf16.gmra.mxu0 %v301
    %v430 = vpop.f32.mrf.mxu0
    %v431 = vadd.f32 %v323, %v430
    %v432 = vpop.f32.mrf.mxu0
    %v433 = vpop.f32.mrf.mxu0
    %v434 = vadd.f32 %v323, %v433
    %v435 = vpop.f32.mrf.mxu0
    %436 = vdwg.mxu0
    %v437 = vmax.f32 %v407, 0.0
    %v438 = vmax.f32 %v410, 0.0
    %v439 = vmax.f32 %v415, 0.0
    %v440 = vmax.f32 %v418, 0.0
    %v441 = vmax.f32 %v423, 0.0
    %v442 = vmax.f32 %v426, 0.0
    %v443 = vmax.f32 %v431, 0.0
    %v444 = vmax.f32 %v434, 0.0
    %v445 = vpack.c.bf16 %v438, %v437
    %v446 = vpack.c.bf16 %v440, %v439
    %v447 = vpack.c.bf16 %v442, %v441
    %v448 = vpack.c.bf16 %v444, %v443
    %s449 = scalar_lea.vmem [#allocation2], 128
    %v450 = vld [vmem:[%s449] sm:$0xf]
    %v451 = vld [vmem:[%s449 + $0x4] sm:$0xf]
    %v452 = vld [vmem:[%s449 + $0x8] sm:$0xf]
    %v453 = vld [vmem:[%s449 + $0xc] sm:$0xf]
    %v454 = vld [vmem:[%s449 + $0x10] sm:$0xf]
    %v455 = vld [vmem:[%s449 + $0x14] sm:$0xf]
    %v456 = vld [vmem:[%s449 + $0x18] sm:$0xf]
    %v457 = vld [vmem:[%s449 + $0x1c] sm:$0xf]
    %v458 = vld [vmem:[%s449 + $0x20] sm:$0xf]
    %v459 = vld [vmem:[%s449 + $0x24] sm:$0xf]
    %v460 = vld [vmem:[%s449 + $0x28] sm:$0xf]
    %v461 = vld [vmem:[%s449 + $0x2c] sm:$0xf]
    %v462 = vld [vmem:[%s449 + $0x30] sm:$0xf]
    %v463 = vld [vmem:[%s449 + $0x34] sm:$0xf]
    %v464 = vld [vmem:[%s449 + $0x38] sm:$0xf]
    %v465 = vld [vmem:[%s449 + $0x3c] sm:$0xf]
    %v466 = vld [vmem:[%s3 + $0x3] sm:$0x1]
    %v467 = vlaneseq
    %v468 = vshrl.u32 %v467, 7
    %v469 = vsub.s32 0, %v468
    %v470 = vrot.slane %v466, %v469
    %v487 = vunpack.c.l.b16 %v450
    %v488 = vunpack.c.l.b16 %v451
    %v489 = vunpack.c.l.b16 %v452
    %v490 = vunpack.c.l.b16 %v453
    %v491 = vunpack.c.l.b16 %v454
    %v492 = vunpack.c.l.b16 %v455
    %v493 = vunpack.c.l.b16 %v456
    %v494 = vunpack.c.l.b16 %v457
    %v495 = vunpack.c.l.b16 %v458
    %v496 = vunpack.c.l.b16 %v459
    %v497 = vunpack.c.l.b16 %v460
    %v498 = vunpack.c.l.b16 %v461
    %v499 = vunpack.c.l.b16 %v462
    %v500 = vunpack.c.l.b16 %v463
    %v501 = vunpack.c.l.b16 %v464
    %v502 = vunpack.c.l.b16 %v465
    %v503 = vpack.c.b16 %v488, %v487
    %v504 = vpack.c.b16 %v490, %v489
    %v505 = vpack.c.b16 %v492, %v491
    %v506 = vpack.c.b16 %v494, %v493
    %v507 = vpack.c.b16 %v496, %v495
    %v508 = vpack.c.b16 %v498, %v497
    %v509 = vpack.c.b16 %v500, %v499
    %v510 = vpack.c.b16 %v502, %v501
    %519 = vmatprep.subr.bf16.mxu0 0
    %520 = vmatpush1.bf16.msra.mxu0 %v510
    %521 = vmatprep.subr.bf16.mxu0 0
    %522 = vmatpush1.bf16.msra.mxu0 %v509
    %523 = vmatprep.subr.bf16.mxu0 0
    %524 = vmatpush1.bf16.msra.mxu0 %v508
    %525 = vmatprep.subr.bf16.mxu0 0
    %526 = vmatpush1.bf16.msra.mxu0 %v507
    %527 = vmatprep.subr.bf16.mxu0 0
    %528 = vmatpush1.bf16.msra.mxu0 %v506
    %529 = vmatprep.subr.bf16.mxu0 0
    %530 = vmatpush1.bf16.msra.mxu0 %v505
    %531 = vmatprep.subr.bf16.mxu0 0
    %532 = vmatpush1.bf16.msra.mxu0 %v504
    %533 = vmatprep.subr.bf16.mxu0 0
    %534 = vmatpush1.bf16.msra.mxu0 %v503
    %535 = vmatprep.subr.bf16.mxu0 0
    %536 = vmatpush2.bf16.msra.mxu0 0
    %537 = vmatprep.subr.bf16.mxu0 0
    %538 = vmatpush2.bf16.msra.mxu0 0
    %539 = vmatprep.subr.bf16.mxu0 0
    %540 = vmatpush2.bf16.msra.mxu0 0
    %541 = vmatprep.subr.bf16.mxu0 0
    %542 = vmatpush2.bf16.msra.mxu0 0
    %543 = vmatprep.subr.bf16.mxu0 0
    %544 = vmatpush2.bf16.msra.mxu0 0
    %545 = vmatprep.subr.bf16.mxu0 0
    %546 = vmatpush2.bf16.msra.mxu0 0
    %547 = vmatprep.subr.bf16.mxu0 0
    %548 = vmatpush2.bf16.msra.mxu0 0
    %549 = vmatprep.subr.bf16.mxu0 0
    %550 = vmatpush2.bf16.msra.mxu0 0
    %551 = vmatprep.mubr.bf16.mxu0 0
    %552 = vmatmul.mubr.bf16.gmra.mxu0 %v445
    %v553 = vpop.f32.mrf.mxu0
    %v554 = vadd.f32 %v470, %v553
    %v555 = vpop.f32.mrf.mxu0
    %v556 = vpop.f32.mrf.mxu0
    %v557 = vadd.f32 %v470, %v556
    %v558 = vpop.f32.mrf.mxu0
    %559 = vmatprep.mubr.bf16.mxu0 0
    %560 = vmatmul.mubr.bf16.gmra.mxu0 %v446
    %v561 = vpop.f32.mrf.mxu0
    %v562 = vadd.f32 %v470, %v561
    %v563 = vpop.f32.mrf.mxu0
    %v564 = vpop.f32.mrf.mxu0
    %v565 = vadd.f32 %v470, %v564
    %v566 = vpop.f32.mrf.mxu0
    %567 = vmatprep.mubr.bf16.mxu0 0
    %568 = vmatmul.mubr.bf16.gmra.mxu0 %v447
    %v569 = vpop.f32.mrf.mxu0
    %v570 = vadd.f32 %v470, %v569
    %v571 = vpop.f32.mrf.mxu0
    %v572 = vpop.f32.mrf.mxu0
    %v573 = vadd.f32 %v470, %v572
    %v574 = vpop.f32.mrf.mxu0
    %575 = vmatprep.mubr.bf16.mxu0 0
    %576 = vmatmul.mubr.bf16.gmra.mxu0 %v448
    %v577 = vpop.f32.mrf.mxu0
    %v578 = vadd.f32 %v470, %v577
    %v579 = vpop.f32.mrf.mxu0
    %v580 = vpop.f32.mrf.mxu0
    %v581 = vadd.f32 %v470, %v580
    %v582 = vpop.f32.mrf.mxu0
    %583 = vdwg.mxu0
    %v584 = vmax.f32 %v554, 0.0
    %v585 = vmax.f32 %v557, 0.0
    %v586 = vmax.f32 %v562, 0.0
    %v587 = vmax.f32 %v565, 0.0
    %v588 = vmax.f32 %v570, 0.0
    %v589 = vmax.f32 %v573, 0.0
    %v590 = vmax.f32 %v578, 0.0
    %v591 = vmax.f32 %v581, 0.0
    %v592 = vpack.c.bf16 %v585, %v584
    %v593 = vpack.c.bf16 %v587, %v586
    %v594 = vpack.c.bf16 %v589, %v588
    %v595 = vpack.c.bf16 %v591, %v590
    %s596 = scalar_lea.vmem [#allocation2], 192
    %v597 = vld [vmem:[%s596] sm:$0xf]
    %v598 = vld [vmem:[%s596 + $0x4] sm:$0xf]
    %v599 = vld [vmem:[%s596 + $0x8] sm:$0xf]
    %v600 = vld [vmem:[%s596 + $0xc] sm:$0xf]
    %v601 = vld [vmem:[%s596 + $0x10] sm:$0xf]
    %v602 = vld [vmem:[%s596 + $0x14] sm:$0xf]
    %v603 = vld [vmem:[%s596 + $0x18] sm:$0xf]
    %v604 = vld [vmem:[%s596 + $0x1c] sm:$0xf]
    %v605 = vld [vmem:[%s596 + $0x20] sm:$0xf]
    %v606 = vld [vmem:[%s596 + $0x24] sm:$0xf]
    %v607 = vld [vmem:[%s596 + $0x28] sm:$0xf]
    %v608 = vld [vmem:[%s596 + $0x2c] sm:$0xf]
    %v609 = vld [vmem:[%s596 + $0x30] sm:$0xf]
    %v610 = vld [vmem:[%s596 + $0x34] sm:$0xf]
    %v611 = vld [vmem:[%s596 + $0x38] sm:$0xf]
    %v612 = vld [vmem:[%s596 + $0x3c] sm:$0xf]
    %v613 = vld [vmem:[%s3 + $0x4] sm:$0x1]
    %v614 = vlaneseq
    %v615 = vshrl.u32 %v614, 7
    %v616 = vsub.s32 0, %v615
    %v617 = vrot.slane %v613, %v616
    %v634 = vunpack.c.l.b16 %v597
    %v635 = vunpack.c.l.b16 %v598
    %v636 = vunpack.c.l.b16 %v599
    %v637 = vunpack.c.l.b16 %v600
    %v638 = vunpack.c.l.b16 %v601
    %v639 = vunpack.c.l.b16 %v602
    %v640 = vunpack.c.l.b16 %v603
    %v641 = vunpack.c.l.b16 %v604
    %v642 = vunpack.c.l.b16 %v605
    %v643 = vunpack.c.l.b16 %v606
    %v644 = vunpack.c.l.b16 %v607
    %v645 = vunpack.c.l.b16 %v608
    %v646 = vunpack.c.l.b16 %v609
    %v647 = vunpack.c.l.b16 %v610
    %v648 = vunpack.c.l.b16 %v611
    %v649 = vunpack.c.l.b16 %v612
    %v650 = vpack.c.b16 %v635, %v634
    %v651 = vpack.c.b16 %v637, %v636
    %v652 = vpack.c.b16 %v639, %v638
    %v653 = vpack.c.b16 %v641, %v640
    %v654 = vpack.c.b16 %v643, %v642
    %v655 = vpack.c.b16 %v645, %v644
    %v656 = vpack.c.b16 %v647, %v646
    %v657 = vpack.c.b16 %v649, %v648
    %666 = vmatprep.subr.bf16.mxu0 0
    %667 = vmatpush1.bf16.msra.mxu0 %v657
    %668 = vmatprep.subr.bf16.mxu0 0
    %669 = vmatpush1.bf16.msra.mxu0 %v656
    %670 = vmatprep.subr.bf16.mxu0 0
    %671 = vmatpush1.bf16.msra.mxu0 %v655
    %672 = vmatprep.subr.bf16.mxu0 0
    %673 = vmatpush1.bf16.msra.mxu0 %v654
    %674 = vmatprep.subr.bf16.mxu0 0
    %675 = vmatpush1.bf16.msra.mxu0 %v653
    %676 = vmatprep.subr.bf16.mxu0 0
    %677 = vmatpush1.bf16.msra.mxu0 %v652
    %678 = vmatprep.subr.bf16.mxu0 0
    %679 = vmatpush1.bf16.msra.mxu0 %v651
    %680 = vmatprep.subr.bf16.mxu0 0
    %681 = vmatpush1.bf16.msra.mxu0 %v650
    %682 = vmatprep.subr.bf16.mxu0 0
    %683 = vmatpush2.bf16.msra.mxu0 0
    %684 = vmatprep.subr.bf16.mxu0 0
    %685 = vmatpush2.bf16.msra.mxu0 0
    %686 = vmatprep.subr.bf16.mxu0 0
    %687 = vmatpush2.bf16.msra.mxu0 0
    %688 = vmatprep.subr.bf16.mxu0 0
    %689 = vmatpush2.bf16.msra.mxu0 0
    %690 = vmatprep.subr.bf16.mxu0 0
    %691 = vmatpush2.bf16.msra.mxu0 0
    %692 = vmatprep.subr.bf16.mxu0 0
    %693 = vmatpush2.bf16.msra.mxu0 0
    %694 = vmatprep.subr.bf16.mxu0 0
    %695 = vmatpush2.bf16.msra.mxu0 0
    %696 = vmatprep.subr.bf16.mxu0 0
    %697 = vmatpush2.bf16.msra.mxu0 0
    %698 = vmatprep.mubr.bf16.mxu0 0
    %699 = vmatmul.mubr.bf16.gmra.mxu0 %v592
    %v700 = vpop.f32.mrf.mxu0
    %v701 = vadd.f32 %v617, %v700
    %v702 = vpop.f32.mrf.mxu0
    %v703 = vpop.f32.mrf.mxu0
    %v704 = vadd.f32 %v617, %v703
    %v705 = vpop.f32.mrf.mxu0
    %706 = vmatprep.mubr.bf16.mxu0 0
    %707 = vmatmul.mubr.bf16.gmra.mxu0 %v593
    %v708 = vpop.f32.mrf.mxu0
    %v709 = vadd.f32 %v617, %v708
    %v710 = vpop.f32.mrf.mxu0
    %v711 = vpop.f32.mrf.mxu0
    %v712 = vadd.f32 %v617, %v711
    %v713 = vpop.f32.mrf.mxu0
    %714 = vmatprep.mubr.bf16.mxu0 0
    %715 = vmatmul.mubr.bf16.gmra.mxu0 %v594
    %v716 = vpop.f32.mrf.mxu0
    %v717 = vadd.f32 %v617, %v716
    %v718 = vpop.f32.mrf.mxu0
    %v719 = vpop.f32.mrf.mxu0
    %v720 = vadd.f32 %v617, %v719
    %v721 = vpop.f32.mrf.mxu0
    %722 = vmatprep.mubr.bf16.mxu0 0
    %723 = vmatmul.mubr.bf16.gmra.mxu0 %v595
    %v724 = vpop.f32.mrf.mxu0
    %v725 = vadd.f32 %v617, %v724
    %v726 = vpop.f32.mrf.mxu0
    %v727 = vpop.f32.mrf.mxu0
    %v728 = vadd.f32 %v617, %v727
    %v729 = vpop.f32.mrf.mxu0
    %730 = vdwg.mxu0
    %v731 = vtanh.pop %v701
    %v732 = vtanh.pop %v704
    %v733 = vtanh.pop %v709
    %v734 = vtanh.pop %v712
    %v735 = vtanh.pop %v717
    %v736 = vtanh.pop %v720
    %v737 = vtanh.pop %v725
    %v738 = vtanh.pop %v728
    %v739 = vpack.c.bf16 %v732, %v731
    %v740 = vpack.c.bf16 %v734, %v733
    %v741 = vpack.c.bf16 %v736, %v735
    %v742 = vpack.c.bf16 %v738, %v737
    %v747 = vunpack.c.l.b16 %v739
    %v748 = vunpack.c.h.b16 %v739
    %v749 = vunpack.c.l.b16 %v740
    %v750 = vunpack.c.h.b16 %v740
    %v751 = vunpack.c.l.b16 %v741
    %v752 = vunpack.c.h.b16 %v741
    %v753 = vunpack.c.l.b16 %v742
    %v754 = vunpack.c.h.b16 %v742
    %v755 = vpack.c.b16 %v747, %v747
    %v756 = vpack.c.b16 %v748, %v748
    %v757 = vpack.c.b16 %v749, %v749
    %v758 = vpack.c.b16 %v750, %v750
    %v759 = vpack.c.b16 %v751, %v751
    %v760 = vpack.c.b16 %v752, %v752
    %v761 = vpack.c.b16 %v753, %v753
    %v762 = vpack.c.b16 %v754, %v754
    %771 = vst [vmem:[#allocation5] sm:$0xf] %v755
    %772 = vst [vmem:[#allocation5 + $0x4] sm:$0xf] %v756
    %773 = vst [vmem:[#allocation5 + $0x8] sm:$0xf] %v757
    %774 = vst [vmem:[#allocation5 + $0xc] sm:$0xf] %v758
    %775 = vst [vmem:[#allocation5 + $0x10] sm:$0xf] %v759
    %776 = vst [vmem:[#allocation5 + $0x14] sm:$0xf] %v760
    %777 = vst [vmem:[#allocation5 + $0x18] sm:$0xf] %v761
    %778 = vst [vmem:[#allocation5 + $0x1c] sm:$0xf] %v762
    // Predicated region
    $region22: #{tpu_custom_call.1} parent=1 // pred_check
      _
    $region23: #{tpu_custom_call.1} parent=1 // pred_check_branch
      %780 = sbr.rel (0) target = $region25
    $region24: #{tpu_custom_call.1} parent=1 // pred_region
      %s782 = ssub.s32 512, 512
      %783 = vsyncadd [#allocation4], %s782
      %s784 = sshll.u32 [#allocation5], 4
      %s785 = int_to_ptr.vmem [resolvable:$true] %s784
      %790 = dma.vmem_to_hbm [thread:$0]  %s785, 512, %s4, [#allocation4], 64, 64, 4
    $region25: #{tpu_custom_call.1} parent=1 // pred_fallthru
      _
    // Predicated region
    $region26: #{tpu_custom_call.1} parent=1 // pred_check
      _
    $region27: #{tpu_custom_call.1} parent=1 // pred_check_branch
      %792 = sbr.rel (0) target = $region29
    $region28: #{tpu_custom_call.1} parent=1 // pred_region
      %793 = dma.done [#allocation4], 512
    $region29: #{tpu_custom_call.1} parent=1 // pred_fallthru
      _
    %794 = vsyncpa [#allocation3], 1
    %795 = vsyncpa [#allocation4], 1

// kernel: tpu_custom_call.1
$region0: #{tpu_custom_call.1}
  #allocation0 [shape = 'u32[]', space=smem, size = 0x4, offset = 0x4, fixed_abs, tag = 'smem constant byte address 0x4 - core index']
  #allocation1 [shape = 'u32[144,128]{1,0:T(1,128)}', space=vmem, size = 0x12000, scoped, tag = 'internal scratch']
  %s0 = inlined_call_operand.vmem [shape: f32[64,32], index: 0, kind: input, shape index: {}]
  %s1 = inlined_call_operand.vmem [shape: bf16[32,128], index: 1, kind: input, shape index: {}]
  %s2 = inlined_call_operand.hbm [shape: bf16[4,128,128], index: 2, kind: input, shape index: {}]
  %s3 = inlined_call_operand.vmem [shape: f32[8,128], index: 3, kind: input, shape index: {}]
  %s4 = inlined_call_operand.hbm [shape: bf16[64,128], index: 4, kind: output, shape index: {}]
  %s5 = sld [smem:[#allocation0]]
  $region30: #{tpu_custom_call.1} parent=0
    _
  %s7 = ssub.s32 1, %s5
  %s8 = scalar_select 0, %s7, %s5
  $region1: #{tpu_custom_call.1} parent=0
    #allocation2 [shape = 'u8[131072]{0}', space=vmem, size = 0x20000, scoped, tag = 'input window, operand 2, single buffered']
    #allocation3 [shape = 's32[1]{0}', space=sflag, size = 0x4, scoped, tag = 'scoped memory for tpu_custom_call.1']
    #allocation4 [shape = 's32[1]{0}', space=sflag, size = 0x4, scoped, tag = 'scoped memory for tpu_custom_call.1']
    #allocation5 [shape = 'u8[16384]{0}', space=vmem, size = 0x4000, scoped, tag = 'output window, operand 0, single buffered']
    %9 = vsyncpa [#allocation3], 0
    %10 = vsyncpa [#allocation4], 0
    // Predicated region
    $region2: #{tpu_custom_call.1} parent=1 // pred_check
      _
    $region3: #{tpu_custom_call.1} parent=1 // pred_check_branch
      %12 = sbr.rel (0) target = $region5
    $region4: #{tpu_custom_call.1} parent=1 // pred_region
      _
    $region5: #{tpu_custom_call.1} parent=1 // pred_fallthru
      _
    // Predicated region
    $region6: #{tpu_custom_call.1} parent=1 // pred_check
      _
    $region7: #{tpu_custom_call.1} parent=1 // pred_check_branch
      %14 = sbr.rel (0) target = $region9
    $region8: #{tpu_custom_call.1} parent=1 // pred_region
      _
    $region9: #{tpu_custom_call.1} parent=1 // pred_fallthru
      _
    // Predicated region
    $region10: #{tpu_custom_call.1} parent=1 // pred_check
      _
    $region11: #{tpu_custom_call.1} parent=1 // pred_check_branch
      %16 = sbr.rel (0) target = $region13
    $region12: #{tpu_custom_call.1} parent=1 // pred_region
      %s18 = ssub.s32 4096, 4096
      %19 = vsyncadd [#allocation3], %s18
      %s20 = sshll.u32 [#allocation2], 4
      %s21 = int_to_ptr.vmem [resolvable:$true] %s20
      %26 = dma.hbm_to_vmem [thread:$0]  %s2, 4096, %s21, [#allocation3], 64, 64, 4
    $region13: #{tpu_custom_call.1} parent=1 // pred_fallthru
      _
    // Predicated region
    $region14: #{tpu_custom_call.1} parent=1 // pred_check
      _
    $region15: #{tpu_custom_call.1} parent=1 // pred_check_branch
      %28 = sbr.rel (0) target = $region17
    $region16: #{tpu_custom_call.1} parent=1 // pred_region
      _
    $region17: #{tpu_custom_call.1} parent=1 // pred_fallthru
      _
    // Predicated region
    $region18: #{tpu_custom_call.1} parent=1 // pred_check
      _
    $region19: #{tpu_custom_call.1} parent=1 // pred_check_branch
      %30 = sbr.rel (0) target = $region21
    $region20: #{tpu_custom_call.1} parent=1 // pred_region
      %31 = dma.done [#allocation3], 4096
    $region21: #{tpu_custom_call.1} parent=1 // pred_fallthru
      _
    %v33 = vld [vmem:[%s0] sm:$0xff]
    %v34 = vld [vmem:[%s0 + $0x8] sm:$0xff]
    %v35 = vld [vmem:[%s0 + $0x10] sm:$0xff]
    %v36 = vld [vmem:[%s0 + $0x18] sm:$0xff]
    %v37 = vld [vmem:[%s0 + $0x20] sm:$0xff]
    %v38 = vld [vmem:[%s0 + $0x28] sm:$0xff]
    %v39 = vld [vmem:[%s0 + $0x30] sm:$0xff]
    %v40 = vld [vmem:[%s0 + $0x38] sm:$0xff]
    %v41 = vpack.c.bf16 %v34, %v33
    %v42 = vpack.c.bf16 %v36, %v35
    %v43 = vpack.c.bf16 %v38, %v37
    %v44 = vpack.c.bf16 %v40, %v39
    %v45 = vld [vmem:[%s1] sm:$0xf]
    %v46 = vld [vmem:[%s1 + $0x4] sm:$0xf]
    %v47 = vld [vmem:[%s1 + $0x8] sm:$0xf]
    %v48 = vld [vmem:[%s1 + $0xc] sm:$0xf]
    %v49 = vld [vmem:[%s3] sm:$0x1]
    %v50 = vlaneseq
    %v51 = vshrl.u32 %v50, 7
    %v52 = vsub.s32 0, %v51
    %v53 = vrot.slane %v49, %v52
    %v58 = vunpack.c.l.b16 %v45
    %v59 = vunpack.c.l.b16 %v46
    %v60 = vunpack.c.l.b16 %v47
    %v61 = vunpack.c.l.b16 %v48
    %v62 = vpack.c.b16 %v59, %v58
    %v63 = vpack.c.b16 %v61, %v60
    %vm66 = vcmask 261120
    %v68 = vsel %vm66, %v41, 0
    %v71 = vsel %vm66, %v42, 0
    %v74 = vsel %vm66, %v43, 0
    %v77 = vsel %vm66, %v44, 0
    %79 = vmatprep.subr.bf16.mxu0 0
    %80 = vmatpush1.bf16.msra.mxu0 0
    %81 = vmatprep.subr.bf16.mxu0 0
    %82 = vmatpush1.bf16.msra.mxu0 0
    %83 = vmatprep.subr.bf16.mxu0 0
    %84 = vmatpush1.bf16.msra.mxu0 0
    %85 = vmatprep.subr.bf16.mxu0 0
    %86 = vmatpush1.bf16.msra.mxu0 0
    %87 = vmatprep.subr.bf16.mxu0 0
    %88 = vmatpush1.bf16.msra.mxu0 0
    %89 = vmatprep.subr.bf16.mxu0 0
    %90 = vmatpush1.bf16.msra.mxu0 0
    %91 = vmatprep.subr.bf16.mxu0 0
    %92 = vmatpush1.bf16.msra.mxu0 %v63
    %93 = vmatprep.subr.bf16.mxu0 0
    %94 = vmatpush1.bf16.msra.mxu0 %v62
    %95 = vmatprep.subr.bf16.mxu0 0
    %96 = vmatpush2.bf16.msra.mxu0 0
    %97 = vmatprep.subr.bf16.mxu0 0
    %98 = vmatpush2.bf16.msra.mxu0 0
    %99 = vmatprep.subr.bf16.mxu0 0
    %100 = vmatpush2.bf16.msra.mxu0 0
    %101 = vmatprep.subr.bf16.mxu0 0
    %102 = vmatpush2.bf16.msra.mxu0 0
    %103 = vmatprep.subr.bf16.mxu0 0
    %104 = vmatpush2.bf16.msra.mxu0 0
    %105 = vmatprep.subr.bf16.mxu0 0
    %106 = vmatpush2.bf16.msra.mxu0 0
    %107 = vmatprep.subr.bf16.mxu0 0
    %108 = vmatpush2.bf16.msra.mxu0 0
    %109 = vmatprep.subr.bf16.mxu0 0
    %110 = vmatpush2.bf16.msra.mxu0 0
    %111 = vmatprep.mubr.bf16.mxu0 0
    %112 = vmatmul.mubr.bf16.gmra.mxu0 %v68
    %v113 = vpop.f32.mrf.mxu0
    %v114 = vadd.f32 %v53, %v113
    %v115 = vpop.f32.mrf.mxu0
    %v116 = vpop.f32.mrf.mxu0
    %v117 = vadd.f32 %v53, %v116
    %v118 = vpop.f32.mrf.mxu0
    %119 = vmatprep.mubr.bf16.mxu0 0
    %120 = vmatmul.mubr.bf16.gmra.mxu0 %v71
    %v121 = vpop.f32.mrf.mxu0
    %v122 = vadd.f32 %v53, %v121
    %v123 = vpop.f32.mrf.mxu0
    %v124 = vpop.f32.mrf.mxu0
    %v125 = vadd.f32 %v53, %v124
    %v126 = vpop.f32.mrf.mxu0
    %127 = vmatprep.mubr.bf16.mxu0 0
    %128 = vmatmul.mubr.bf16.gmra.mxu0 %v74
    %v129 = vpop.f32.mrf.mxu0
    %v130 = vadd.f32 %v53, %v129
    %v131 = vpop.f32.mrf.mxu0
    %v132 = vpop.f32.mrf.mxu0
    %v133 = vadd.f32 %v53, %v132
    %v134 = vpop.f32.mrf.mxu0
    %135 = vmatprep.mubr.bf16.mxu0 0
    %136 = vmatmul.mubr.bf16.gmra.mxu0 %v77
    %v137 = vpop.f32.mrf.mxu0
    %v138 = vadd.f32 %v53, %v137
    %v139 = vpop.f32.mrf.mxu0
    %v140 = vpop.f32.mrf.mxu0
    %v141 = vadd.f32 %v53, %v140
    %v142 = vpop.f32.mrf.mxu0
    %143 = vdwg.mxu0
    %v144 = vmax.f32 %v114, 0.0
    %v145 = vmax.f32 %v117, 0.0
    %v146 = vmax.f32 %v122, 0.0
    %v147 = vmax.f32 %v125, 0.0
    %v148 = vmax.f32 %v130, 0.0
    %v149 = vmax.f32 %v133, 0.0
    %v150 = vmax.f32 %v138, 0.0
    %v151 = vmax.f32 %v141, 0.0
    %v152 = vpack.c.bf16 %v145, %v144
    %v153 = vpack.c.bf16 %v147, %v146
    %v154 = vpack.c.bf16 %v149, %v148
    %v155 = vpack.c.bf16 %v151, %v150
    %v156 = vld [vmem:[#allocation2] sm:$0xf]
    %v157 = vld [vmem:[#allocation2 + $0x4] sm:$0xf]
    %v158 = vld [vmem:[#allocation2 + $0x8] sm:$0xf]
    %v159 = vld [vmem:[#allocation2 + $0xc] sm:$0xf]
    %v160 = vld [vmem:[#allocation2 + $0x10] sm:$0xf]
    %v161 = vld [vmem:[#allocation2 + $0x14] sm:$0xf]
    %v162 = vld [vmem:[#allocation2 + $0x18] sm:$0xf]
    %v163 = vld [vmem:[#allocation2 + $0x1c] sm:$0xf]
    %v164 = vld [vmem:[#allocation2 + $0x20] sm:$0xf]
    %v165 = vld [vmem:[#allocation2 + $0x24] sm:$0xf]
    %v166 = vld [vmem:[#allocation2 + $0x28] sm:$0xf]
    %v167 = vld [vmem:[#allocation2 + $0x2c] sm:$0xf]
    %v168 = vld [vmem:[#allocation2 + $0x30] sm:$0xf]
    %v169 = vld [vmem:[#allocation2 + $0x34] sm:$0xf]
    %v170 = vld [vmem:[#allocation2 + $0x38] sm:$0xf]
    %v171 = vld [vmem:[#allocation2 + $0x3c] sm:$0xf]
    %v172 = vld [vmem:[%s3 + $0x1] sm:$0x1]
    %v173 = vlaneseq
    %v174 = vshrl.u32 %v173, 7
    %v175 = vsub.s32 0, %v174
    %v176 = vrot.slane %v172, %v175
    %v193 = vunpack.c.l.b16 %v156
    %v194 = vunpack.c.l.b16 %v157
    %v195 = vunpack.c.l.b16 %v158
    %v196 = vunpack.c.l.b16 %v159
    %v197 = vunpack.c.l.b16 %v160
    %v198 = vunpack.c.l.b16 %v161
    %v199 = vunpack.c.l.b16 %v162
    %v200 = vunpack.c.l.b16 %v163
    %v201 = vunpack.c.l.b16 %v164
    %v202 = vunpack.c.l.b16 %v165
    %v203 = vunpack.c.l.b16 %v166
    %v204 = vunpack.c.l.b16 %v167
    %v205 = vunpack.c.l.b16 %v168
    %v206 = vunpack.c.l.b16 %v169
    %v207 = vunpack.c.l.b16 %v170
    %v208 = vunpack.c.l.b16 %v171
    %v209 = vpack.c.b16 %v194, %v193
    %v210 = vpack.c.b16 %v196, %v195
    %v211 = vpack.c.b16 %v198, %v197
    %v212 = vpack.c.b16 %v200, %v199
    %v213 = vpack.c.b16 %v202, %v201
    %v214 = vpack.c.b16 %v204, %v203
    %v215 = vpack.c.b16 %v206, %v205
    %v216 = vpack.c.b16 %v208, %v207
    %225 = vmatprep.subr.bf16.mxu0 0
    %226 = vmatpush1.bf16.msra.mxu0 %v216
    %227 = vmatprep.subr.bf16.mxu0 0
    %228 = vmatpush1.bf16.msra.mxu0 %v215
    %229 = vmatprep.subr.bf16.mxu0 0
    %230 = vmatpush1.bf16.msra.mxu0 %v214
    %231 = vmatprep.subr.bf16.mxu0 0
    %232 = vmatpush1.bf16.msra.mxu0 %v213
    %233 = vmatprep.subr.bf16.mxu0 0
    %234 = vmatpush1.bf16.msra.mxu0 %v212
    %235 = vmatprep.subr.bf16.mxu0 0
    %236 = vmatpush1.bf16.msra.mxu0 %v211
    %237 = vmatprep.subr.bf16.mxu0 0
    %238 = vmatpush1.bf16.msra.mxu0 %v210
    %239 = vmatprep.subr.bf16.mxu0 0
    %240 = vmatpush1.bf16.msra.mxu0 %v209
    %241 = vmatprep.subr.bf16.mxu0 0
    %242 = vmatpush2.bf16.msra.mxu0 0
    %243 = vmatprep.subr.bf16.mxu0 0
    %244 = vmatpush2.bf16.msra.mxu0 0
    %245 = vmatprep.subr.bf16.mxu0 0
    %246 = vmatpush2.bf16.msra.mxu0 0
    %247 = vmatprep.subr.bf16.mxu0 0
    %248 = vmatpush2.bf16.msra.mxu0 0
    %249 = vmatprep.subr.bf16.mxu0 0
    %250 = vmatpush2.bf16.msra.mxu0 0
    %251 = vmatprep.subr.bf16.mxu0 0
    %252 = vmatpush2.bf16.msra.mxu0 0
    %253 = vmatprep.subr.bf16.mxu0 0
    %254 = vmatpush2.bf16.msra.mxu0 0
    %255 = vmatprep.subr.bf16.mxu0 0
    %256 = vmatpush2.bf16.msra.mxu0 0
    %257 = vmatprep.mubr.bf16.mxu0 0
    %258 = vmatmul.mubr.bf16.gmra.mxu0 %v152
    %v259 = vpop.f32.mrf.mxu0
    %v260 = vadd.f32 %v176, %v259
    %v261 = vpop.f32.mrf.mxu0
    %v262 = vpop.f32.mrf.mxu0
    %v263 = vadd.f32 %v176, %v262
    %v264 = vpop.f32.mrf.mxu0
    %265 = vmatprep.mubr.bf16.mxu0 0
    %266 = vmatmul.mubr.bf16.gmra.mxu0 %v153
    %v267 = vpop.f32.mrf.mxu0
    %v268 = vadd.f32 %v176, %v267
    %v269 = vpop.f32.mrf.mxu0
    %v270 = vpop.f32.mrf.mxu0
    %v271 = vadd.f32 %v176, %v270
    %v272 = vpop.f32.mrf.mxu0
    %273 = vmatprep.mubr.bf16.mxu0 0
    %274 = vmatmul.mubr.bf16.gmra.mxu0 %v154
    %v275 = vpop.f32.mrf.mxu0
    %v276 = vadd.f32 %v176, %v275
    %v277 = vpop.f32.mrf.mxu0
    %v278 = vpop.f32.mrf.mxu0
    %v279 = vadd.f32 %v176, %v278
    %v280 = vpop.f32.mrf.mxu0
    %281 = vmatprep.mubr.bf16.mxu0 0
    %282 = vmatmul.mubr.bf16.gmra.mxu0 %v155
    %v283 = vpop.f32.mrf.mxu0
    %v284 = vadd.f32 %v176, %v283
    %v285 = vpop.f32.mrf.mxu0
    %v286 = vpop.f32.mrf.mxu0
    %v287 = vadd.f32 %v176, %v286
    %v288 = vpop.f32.mrf.mxu0
    %289 = vdwg.mxu0
    %v290 = vmax.f32 %v260, 0.0
    %v291 = vmax.f32 %v263, 0.0
    %v292 = vmax.f32 %v268, 0.0
    %v293 = vmax.f32 %v271, 0.0
    %v294 = vmax.f32 %v276, 0.0
    %v295 = vmax.f32 %v279, 0.0
    %v296 = vmax.f32 %v284, 0.0
    %v297 = vmax.f32 %v287, 0.0
    %v298 = vpack.c.bf16 %v291, %v290
    %v299 = vpack.c.bf16 %v293, %v292
    %v300 = vpack.c.bf16 %v295, %v294
    %v301 = vpack.c.bf16 %v297, %v296
    %s302 = scalar_lea.vmem [#allocation2], 64
    %v303 = vld [vmem:[%s302] sm:$0xf]
    %v304 = vld [vmem:[%s302 + $0x4] sm:$0xf]
    %v305 = vld [vmem:[%s302 + $0x8] sm:$0xf]
    %v306 = vld [vmem:[%s302 + $0xc] sm:$0xf]
    %v307 = vld [vmem:[%s302 + $0x10] sm:$0xf]
    %v308 = vld [vmem:[%s302 + $0x14] sm:$0xf]
    %v309 = vld [vmem:[%s302 + $0x18] sm:$0xf]
    %v310 = vld [vmem:[%s302 + $0x1c] sm:$0xf]
    %v311 = vld [vmem:[%s302 + $0x20] sm:$0xf]
    %v312 = vld [vmem:[%s302 + $0x24] sm:$0xf]
    %v313 = vld [vmem:[%s302 + $0x28] sm:$0xf]
    %v314 = vld [vmem:[%s302 + $0x2c] sm:$0xf]
    %v315 = vld [vmem:[%s302 + $0x30] sm:$0xf]
    %v316 = vld [vmem:[%s302 + $0x34] sm:$0xf]
    %v317 = vld [vmem:[%s302 + $0x38] sm:$0xf]
    %v318 = vld [vmem:[%s302 + $0x3c] sm:$0xf]
    %v319 = vld [vmem:[%s3 + $0x2] sm:$0x1]
    %v320 = vlaneseq
    %v321 = vshrl.u32 %v320, 7
    %v322 = vsub.s32 0, %v321
    %v323 = vrot.slane %v319, %v322
    %v340 = vunpack.c.l.b16 %v303
    %v341 = vunpack.c.l.b16 %v304
    %v342 = vunpack.c.l.b16 %v305
    %v343 = vunpack.c.l.b16 %v306
    %v344 = vunpack.c.l.b16 %v307
    %v345 = vunpack.c.l.b16 %v308
    %v346 = vunpack.c.l.b16 %v309
    %v347 = vunpack.c.l.b16 %v310
    %v348 = vunpack.c.l.b16 %v311
    %v349 = vunpack.c.l.b16 %v312
    %v350 = vunpack.c.l.b16 %v313
    %v351 = vunpack.c.l.b16 %v314
    %v352 = vunpack.c.l.b16 %v315
    %v353 = vunpack.c.l.b16 %v316
    %v354 = vunpack.c.l.b16 %v317
    %v355 = vunpack.c.l.b16 %v318
    %v356 = vpack.c.b16 %v341, %v340
    %v357 = vpack.c.b16 %v343, %v342
    %v358 = vpack.c.b16 %v345, %v344
    %v359 = vpack.c.b16 %v347, %v346
    %v360 = vpack.c.b16 %v349, %v348
    %v361 = vpack.c.b16 %v351, %v350
    %v362 = vpack.c.b16 %v353, %v352
    %v363 = vpack.c.b16 %v355, %v354
    %372 = vmatprep.subr.bf16.mxu0 0
    %373 = vmatpush1.bf16.msra.mxu0 %v363
    %374 = vmatprep.subr.bf16.mxu0 0
    %375 = vmatpush1.bf16.msra.mxu0 %v362
    %376 = vmatprep.subr.bf16.mxu0 0
    %377 = vmatpush1.bf16.msra.mxu0 %v361
    %378 = vmatprep.subr.bf16.mxu0 0
    %379 = vmatpush1.bf16.msra.mxu0 %v360
    %380 = vmatprep.subr.bf16.mxu0 0
    %381 = vmatpush1.bf16.msra.mxu0 %v359
    %382 = vmatprep.subr.bf16.mxu0 0
    %383 = vmatpush1.bf16.msra.mxu0 %v358
    %384 = vmatprep.subr.bf16.mxu0 0
    %385 = vmatpush1.bf16.msra.mxu0 %v357
    %386 = vmatprep.subr.bf16.mxu0 0
    %387 = vmatpush1.bf16.msra.mxu0 %v356
    %388 = vmatprep.subr.bf16.mxu0 0
    %389 = vmatpush2.bf16.msra.mxu0 0
    %390 = vmatprep.subr.bf16.mxu0 0
    %391 = vmatpush2.bf16.msra.mxu0 0
    %392 = vmatprep.subr.bf16.mxu0 0
    %393 = vmatpush2.bf16.msra.mxu0 0
    %394 = vmatprep.subr.bf16.mxu0 0
    %395 = vmatpush2.bf16.msra.mxu0 0
    %396 = vmatprep.subr.bf16.mxu0 0
    %397 = vmatpush2.bf16.msra.mxu0 0
    %398 = vmatprep.subr.bf16.mxu0 0
    %399 = vmatpush2.bf16.msra.mxu0 0
    %400 = vmatprep.subr.bf16.mxu0 0
    %401 = vmatpush2.bf16.msra.mxu0 0
    %402 = vmatprep.subr.bf16.mxu0 0
    %403 = vmatpush2.bf16.msra.mxu0 0
    %404 = vmatprep.mubr.bf16.mxu0 0
    %405 = vmatmul.mubr.bf16.gmra.mxu0 %v298
    %v406 = vpop.f32.mrf.mxu0
    %v407 = vadd.f32 %v323, %v406
    %v408 = vpop.f32.mrf.mxu0
    %v409 = vpop.f32.mrf.mxu0
    %v410 = vadd.f32 %v323, %v409
    %v411 = vpop.f32.mrf.mxu0
    %412 = vmatprep.mubr.bf16.mxu0 0
    %413 = vmatmul.mubr.bf16.gmra.mxu0 %v299
    %v414 = vpop.f32.mrf.mxu0
    %v415 = vadd.f32 %v323, %v414
    %v416 = vpop.f32.mrf.mxu0
    %v417 = vpop.f32.mrf.mxu0
    %v418 = vadd.f32 %v323, %v417
    %v419 = vpop.f32.mrf.mxu0
    %420 = vmatprep.mubr.bf16.mxu0 0
    %421 = vmatmul.mubr.bf16.gmra.mxu0 %v300
    %v422 = vpop.f32.mrf.mxu0
    %v423 = vadd.f32 %v323, %v422
    %v424 = vpop.f32.mrf.mxu0
    %v425 = vpop.f32.mrf.mxu0
    %v426 = vadd.f32 %v323, %v425
    %v427 = vpop.f32.mrf.mxu0
    %428 = vmatprep.mubr.bf16.mxu0 0
    %429 = vmatmul.mubr.bf16.gmra.mxu0 %v301
    %v430 = vpop.f32.mrf.mxu0
    %v431 = vadd.f32 %v323, %v430
    %v432 = vpop.f32.mrf.mxu0
    %v433 = vpop.f32.mrf.mxu0
    %v434 = vadd.f32 %v323, %v433
    %v435 = vpop.f32.mrf.mxu0
    %436 = vdwg.mxu0
    %v437 = vmax.f32 %v407, 0.0
    %v438 = vmax.f32 %v410, 0.0
    %v439 = vmax.f32 %v415, 0.0
    %v440 = vmax.f32 %v418, 0.0
    %v441 = vmax.f32 %v423, 0.0
    %v442 = vmax.f32 %v426, 0.0
    %v443 = vmax.f32 %v431, 0.0
    %v444 = vmax.f32 %v434, 0.0
    %v445 = vpack.c.bf16 %v438, %v437
    %v446 = vpack.c.bf16 %v440, %v439
    %v447 = vpack.c.bf16 %v442, %v441
    %v448 = vpack.c.bf16 %v444, %v443
    %s449 = scalar_lea.vmem [#allocation2], 128
    %v450 = vld [vmem:[%s449] sm:$0xf]
    %v451 = vld [vmem:[%s449 + $0x4] sm:$0xf]
    %v452 = vld [vmem:[%s449 + $0x8] sm:$0xf]
    %v453 = vld [vmem:[%s449 + $0xc] sm:$0xf]
    %v454 = vld [vmem:[%s449 + $0x10] sm:$0xf]
    %v455 = vld [vmem:[%s449 + $0x14] sm:$0xf]
    %v456 = vld [vmem:[%s449 + $0x18] sm:$0xf]
    %v457 = vld [vmem:[%s449 + $0x1c] sm:$0xf]
    %v458 = vld [vmem:[%s449 + $0x20] sm:$0xf]
    %v459 = vld [vmem:[%s449 + $0x24] sm:$0xf]
    %v460 = vld [vmem:[%s449 + $0x28] sm:$0xf]
    %v461 = vld [vmem:[%s449 + $0x2c] sm:$0xf]
    %v462 = vld [vmem:[%s449 + $0x30] sm:$0xf]
    %v463 = vld [vmem:[%s449 + $0x34] sm:$0xf]
    %v464 = vld [vmem:[%s449 + $0x38] sm:$0xf]
    %v465 = vld [vmem:[%s449 + $0x3c] sm:$0xf]
    %v466 = vld [vmem:[%s3 + $0x3] sm:$0x1]
    %v467 = vlaneseq
    %v468 = vshrl.u32 %v467, 7
    %v469 = vsub.s32 0, %v468
    %v470 = vrot.slane %v466, %v469
    %v487 = vunpack.c.l.b16 %v450
    %v488 = vunpack.c.l.b16 %v451
    %v489 = vunpack.c.l.b16 %v452
    %v490 = vunpack.c.l.b16 %v453
    %v491 = vunpack.c.l.b16 %v454
    %v492 = vunpack.c.l.b16 %v455
    %v493 = vunpack.c.l.b16 %v456
    %v494 = vunpack.c.l.b16 %v457
    %v495 = vunpack.c.l.b16 %v458
    %v496 = vunpack.c.l.b16 %v459
    %v497 = vunpack.c.l.b16 %v460
    %v498 = vunpack.c.l.b16 %v461
    %v499 = vunpack.c.l.b16 %v462
    %v500 = vunpack.c.l.b16 %v463
    %v501 = vunpack.c.l.b16 %v464
    %v502 = vunpack.c.l.b16 %v465
    %v503 = vpack.c.b16 %v488, %v487
    %v504 = vpack.c.b16 %v490, %v489
    %v505 = vpack.c.b16 %v492, %v491
    %v506 = vpack.c.b16 %v494, %v493
    %v507 = vpack.c.b16 %v496, %v495
    %v508 = vpack.c.b16 %v498, %v497
    %v509 = vpack.c.b16 %v500, %v499
    %v510 = vpack.c.b16 %v502, %v501
    %519 = vmatprep.subr.bf16.mxu0 0
    %520 = vmatpush1.bf16.msra.mxu0 %v510
    %521 = vmatprep.subr.bf16.mxu0 0
    %522 = vmatpush1.bf16.msra.mxu0 %v509
    %523 = vmatprep.subr.bf16.mxu0 0
    %524 = vmatpush1.bf16.msra.mxu0 %v508
    %525 = vmatprep.subr.bf16.mxu0 0
    %526 = vmatpush1.bf16.msra.mxu0 %v507
    %527 = vmatprep.subr.bf16.mxu0 0
    %528 = vmatpush1.bf16.msra.mxu0 %v506
    %529 = vmatprep.subr.bf16.mxu0 0
    %530 = vmatpush1.bf16.msra.mxu0 %v505
    %531 = vmatprep.subr.bf16.mxu0 0
    %532 = vmatpush1.bf16.msra.mxu0 %v504
    %533 = vmatprep.subr.bf16.mxu0 0
    %534 = vmatpush1.bf16.msra.mxu0 %v503
    %535 = vmatprep.subr.bf16.mxu0 0
    %536 = vmatpush2.bf16.msra.mxu0 0
    %537 = vmatprep.subr.bf16.mxu0 0
    %538 = vmatpush2.bf16.msra.mxu0 0
    %539 = vmatprep.subr.bf16.mxu0 0
    %540 = vmatpush2.bf16.msra.mxu0 0
    %541 = vmatprep.subr.bf16.mxu0 0
    %542 = vmatpush2.bf16.msra.mxu0 0
    %543 = vmatprep.subr.bf16.mxu0 0
    %544 = vmatpush2.bf16.msra.mxu0 0
    %545 = vmatprep.subr.bf16.mxu0 0
    %546 = vmatpush2.bf16.msra.mxu0 0
    %547 = vmatprep.subr.bf16.mxu0 0
    %548 = vmatpush2.bf16.msra.mxu0 0
    %549 = vmatprep.subr.bf16.mxu0 0
    %550 = vmatpush2.bf16.msra.mxu0 0
    %551 = vmatprep.mubr.bf16.mxu0 0
    %552 = vmatmul.mubr.bf16.gmra.mxu0 %v445
    %v553 = vpop.f32.mrf.mxu0
    %v554 = vadd.f32 %v470, %v553
    %v555 = vpop.f32.mrf.mxu0
    %v556 = vpop.f32.mrf.mxu0
    %v557 = vadd.f32 %v470, %v556
    %v558 = vpop.f32.mrf.mxu0
    %559 = vmatprep.mubr.bf16.mxu0 0
    %560 = vmatmul.mubr.bf16.gmra.mxu0 %v446
    %v561 = vpop.f32.mrf.mxu0
    %v562 = vadd.f32 %v470, %v561
    %v563 = vpop.f32.mrf.mxu0
    %v564 = vpop.f32.mrf.mxu0
    %v565 = vadd.f32 %v470, %v564
    %v566 = vpop.f32.mrf.mxu0
    %567 = vmatprep.mubr.bf16.mxu0 0
    %568 = vmatmul.mubr.bf16.gmra.mxu0 %v447
    %v569 = vpop.f32.mrf.mxu0
    %v570 = vadd.f32 %v470, %v569
    %v571 = vpop.f32.mrf.mxu0
    %v572 = vpop.f32.mrf.mxu0
    %v573 = vadd.f32 %v470, %v572
    %v574 = vpop.f32.mrf.mxu0
    %575 = vmatprep.mubr.bf16.mxu0 0
    %576 = vmatmul.mubr.bf16.gmra.mxu0 %v448
    %v577 = vpop.f32.mrf.mxu0
    %v578 = vadd.f32 %v470, %v577
    %v579 = vpop.f32.mrf.mxu0
    %v580 = vpop.f32.mrf.mxu0
    %v581 = vadd.f32 %v470, %v580
    %v582 = vpop.f32.mrf.mxu0
    %583 = vdwg.mxu0
    %v584 = vmax.f32 %v554, 0.0
    %v585 = vmax.f32 %v557, 0.0
    %v586 = vmax.f32 %v562, 0.0
    %v587 = vmax.f32 %v565, 0.0
    %v588 = vmax.f32 %v570, 0.0
    %v589 = vmax.f32 %v573, 0.0
    %v590 = vmax.f32 %v578, 0.0
    %v591 = vmax.f32 %v581, 0.0
    %v592 = vpack.c.bf16 %v585, %v584
    %v593 = vpack.c.bf16 %v587, %v586
    %v594 = vpack.c.bf16 %v589, %v588
    %v595 = vpack.c.bf16 %v591, %v590
    %s596 = scalar_lea.vmem [#allocation2], 192
    %v597 = vld [vmem:[%s596] sm:$0xf]
    %v598 = vld [vmem:[%s596 + $0x4] sm:$0xf]
    %v599 = vld [vmem:[%s596 + $0x8] sm:$0xf]
    %v600 = vld [vmem:[%s596 + $0xc] sm:$0xf]
    %v601 = vld [vmem:[%s596 + $0x10] sm:$0xf]
    %v602 = vld [vmem:[%s596 + $0x14] sm:$0xf]
    %v603 = vld [vmem:[%s596 + $0x18] sm:$0xf]
    %v604 = vld [vmem:[%s596 + $0x1c] sm:$0xf]
    %v605 = vld [vmem:[%s596 + $0x20] sm:$0xf]
    %v606 = vld [vmem:[%s596 + $0x24] sm:$0xf]
    %v607 = vld [vmem:[%s596 + $0x28] sm:$0xf]
    %v608 = vld [vmem:[%s596 + $0x2c] sm:$0xf]
    %v609 = vld [vmem:[%s596 + $0x30] sm:$0xf]
    %v610 = vld [vmem:[%s596 + $0x34] sm:$0xf]
    %v611 = vld [vmem:[%s596 + $0x38] sm:$0xf]
    %v612 = vld [vmem:[%s596 + $0x3c] sm:$0xf]
    %v613 = vld [vmem:[%s3 + $0x4] sm:$0x1]
    %v614 = vlaneseq
    %v615 = vshrl.u32 %v614, 7
    %v616 = vsub.s32 0, %v615
    %v617 = vrot.slane %v613, %v616
    %v634 = vunpack.c.l.b16 %v597
    %v635 = vunpack.c.l.b16 %v598
    %v636 = vunpack.c.l.b16 %v599
    %v637 = vunpack.c.l.b16 %v600
    %v638 = vunpack.c.l.b16 %v601
    %v639 = vunpack.c.l.b16 %v602
    %v640 = vunpack.c.l.b16 %v603
    %v641 = vunpack.c.l.b16 %v604
    %v642 = vunpack.c.l.b16 %v605
    %v643 = vunpack.c.l.b16 %v606
    %v644 = vunpack.c.l.b16 %v607
    %v645 = vunpack.c.l.b16 %v608
    %v646 = vunpack.c.l.b16 %v609
    %v647 = vunpack.c.l.b16 %v610
    %v648 = vunpack.c.l.b16 %v611
    %v649 = vunpack.c.l.b16 %v612
    %v650 = vpack.c.b16 %v635, %v634
    %v651 = vpack.c.b16 %v637, %v636
    %v652 = vpack.c.b16 %v639, %v638
    %v653 = vpack.c.b16 %v641, %v640
    %v654 = vpack.c.b16 %v643, %v642
    %v655 = vpack.c.b16 %v645, %v644
    %v656 = vpack.c.b16 %v647, %v646
    %v657 = vpack.c.b16 %v649, %v648
    %666 = vmatprep.subr.bf16.mxu0 0
    %667 = vmatpush1.bf16.msra.mxu0 %v657
    %668 = vmatprep.subr.bf16.mxu0 0
    %669 = vmatpush1.bf16.msra.mxu0 %v656
    %670 = vmatprep.subr.bf16.mxu0 0
    %671 = vmatpush1.bf16.msra.mxu0 %v655
    %672 = vmatprep.subr.bf16.mxu0 0
    %673 = vmatpush1.bf16.msra.mxu0 %v654
    %674 = vmatprep.subr.bf16.mxu0 0
    %675 = vmatpush1.bf16.msra.mxu0 %v653
    %676 = vmatprep.subr.bf16.mxu0 0
    %677 = vmatpush1.bf16.msra.mxu0 %v652
    %678 = vmatprep.subr.bf16.mxu0 0
    %679 = vmatpush1.bf16.msra.mxu0 %v651
    %680 = vmatprep.subr.bf16.mxu0 0
    %681 = vmatpush1.bf16.msra.mxu0 %v650
    %682 = vmatprep.subr.bf16.mxu0 0
    %683 = vmatpush2.bf16.msra.mxu0 0
    %684 = vmatprep.subr.bf16.mxu0 0
    %685 = vmatpush2.bf16.msra.mxu0 0
    %686 = vmatprep.subr.bf16.mxu0 0
    %687 = vmatpush2.bf16.msra.mxu0 0
    %688 = vmatprep.subr.bf16.mxu0 0
    %689 = vmatpush2.bf16.msra.mxu0 0
    %690 = vmatprep.subr.bf16.mxu0 0
    %691 = vmatpush2.bf16.msra.mxu0 0
    %692 = vmatprep.subr.bf16.mxu0 0
    %693 = vmatpush2.bf16.msra.mxu0 0
    %694 = vmatprep.subr.bf16.mxu0 0
    %695 = vmatpush2.bf16.msra.mxu0 0
    %696 = vmatprep.subr.bf16.mxu0 0
    %697 = vmatpush2.bf16.msra.mxu0 0
    %698 = vmatprep.mubr.bf16.mxu0 0
    %699 = vmatmul.mubr.bf16.gmra.mxu0 %v592
    %v700 = vpop.f32.mrf.mxu0
    %v701 = vadd.f32 %v617, %v700
    %v702 = vpop.f32.mrf.mxu0
    %v703 = vpop.f32.mrf.mxu0
    %v704 = vadd.f32 %v617, %v703
    %v705 = vpop.f32.mrf.mxu0
    %706 = vmatprep.mubr.bf16.mxu0 0
    %707 = vmatmul.mubr.bf16.gmra.mxu0 %v593
    %v708 = vpop.f32.mrf.mxu0
    %v709 = vadd.f32 %v617, %v708
    %v710 = vpop.f32.mrf.mxu0
    %v711 = vpop.f32.mrf.mxu0
    %v712 = vadd.f32 %v617, %v711
    %v713 = vpop.f32.mrf.mxu0
    %714 = vmatprep.mubr.bf16.mxu0 0
    %715 = vmatmul.mubr.bf16.gmra.mxu0 %v594
    %v716 = vpop.f32.mrf.mxu0
    %v717 = vadd.f32 %v617, %v716
    %v718 = vpop.f32.mrf.mxu0
    %v719 = vpop.f32.mrf.mxu0
    %v720 = vadd.f32 %v617, %v719
    %v721 = vpop.f32.mrf.mxu0
    %722 = vmatprep.mubr.bf16.mxu0 0
    %723 = vmatmul.mubr.bf16.gmra.mxu0 %v595
    %v724 = vpop.f32.mrf.mxu0
    %v725 = vadd.f32 %v617, %v724
    %v726 = vpop.f32.mrf.mxu0
    %v727 = vpop.f32.mrf.mxu0
    %v728 = vadd.f32 %v617, %v727
    %v729 = vpop.f32.mrf.mxu0
    %730 = vdwg.mxu0
    %v731 = vtanh.pop %v701
    %v732 = vtanh.pop %v704
    %v733 = vtanh.pop %v709
    %v734 = vtanh.pop %v712
    %v735 = vtanh.pop %v717
    %v736 = vtanh.pop %v720
    %v737 = vtanh.pop %v725
    %v738 = vtanh.pop %v728
    %v739 = vpack.c.bf16 %v732, %v731
    %v740 = vpack.c.bf16 %v734, %v733
    %v741 = vpack.c.bf16 %v736, %v735
    %v742 = vpack.c.bf16 %v738, %v737
    %v747 = vunpack.c.l.b16 %v739
    %v748 = vunpack.c.h.b16 %v739
    %v749 = vunpack.c.l.b16 %v740
    %v750 = vunpack.c.h.b16 %v740
    %v751 = vunpack.c.l.b16 %v741
    %v752 = vunpack.c.h.b16 %v741
    %v753 = vunpack.c.l.b16 %v742
    %v754 = vunpack.c.h.b16 %v742
    %v755 = vpack.c.b16 %v747, %v747
    %v756 = vpack.c.b16 %v748, %v748
    %v757 = vpack.c.b16 %v749, %v749
    %v758 = vpack.c.b16 %v750, %v750
    %v759 = vpack.c.b16 %v751, %v751
    %v760 = vpack.c.b16 %v752, %v752
    %v761 = vpack.c.b16 %v753, %v753
    %v762 = vpack.c.b16 %v754, %v754
    %771 = vst [vmem:[#allocation5] sm:$0xf] %v755
    %772 = vst [vmem:[#allocation5 + $0x4] sm:$0xf] %v756
    %773 = vst [vmem:[#allocation5 + $0x8] sm:$0xf] %v757
    %774 = vst [vmem:[#allocation5 + $0xc] sm:$0xf] %v758
    %775 = vst [vmem:[#allocation5 + $0x10] sm:$0xf] %v759
    %776 = vst [vmem:[#allocation5 + $0x14] sm:$0xf] %v760
    %777 = vst [vmem:[#allocation5 + $0x18] sm:$0xf] %v761
    %778 = vst [vmem:[#allocation5 + $0x1c] sm:$0xf] %v762
    // Predicated region
    $region22: #{tpu_custom_call.1} parent=1 // pred_check
      _
    $region23: #{tpu_custom_call.1} parent=1 // pred_check_branch
      %780 = sbr.rel (0) target = $region25
    $region24: #{tpu_custom_call.1} parent=1 // pred_region
      %s782 = ssub.s32 512, 512
      %783 = vsyncadd [#allocation4], %s782
      %s784 = sshll.u32 [#allocation5], 4
      %s785 = int_to_ptr.vmem [resolvable:$true] %s784
      %790 = dma.vmem_to_hbm [thread:$0]  %s785, 512, %s4, [#allocation4], 64, 64, 4
    $region25: #{tpu_custom_call.1} parent=1 // pred_fallthru
      _
    // Predicated region
    $region26: #{tpu_custom_call.1} parent=1 // pred_check
      _
    $region27: #{tpu_custom_call.1} parent=1 // pred_check_branch
      %792 = sbr.rel (0) target = $region29
    $region28: #{tpu_custom_call.1} parent=1 // pred_region
      %793 = dma.done [#allocation4], 512
    $region29: #{tpu_custom_call.1} parent=1 // pred_fallthru
      _
    %794 = vsyncpa [#allocation3], 1
    %795 = vsyncpa [#allocation4], 1

</llo_original>
